<compile_context>
chip_gen: v5e
topology: v5e:2x2
jax: 0.10.0
libtpu: 0.0.40
codegen_flags: <defaults>
</compile_context>

<pallas_src>
import math
import numpy as np
import jax
import jax.numpy as jnp
from jax.experimental import pallas as pl
from jax.experimental.pallas import tpu as pltpu


def make_skip_lstm_kernel(n_layers, hidden_size, batch, seq_len):
    H = hidden_size
    B = batch
    T = seq_len

    def kernel(xw_ref, v0_ref, *refs):
        # refs layout:
        #   [W_1, b_1, ..., W_{L-1}, b_{L-1}, skip_w, skip_b,
        #    out_ref, h_fin_ref, c_fin_ref, u_fin_ref]
        n_param = 2 * (n_layers - 1) + 2
        param_refs = refs[:n_param]
        out_ref, h_fin_ref, c_fin_ref, u_fin_ref = refs[n_param:]

        # ---- load weights once (single invocation, fully VMEM-resident) ----
        V0 = v0_ref[...]                              # (H, 4H)
        Ws = [param_refs[2 * i][...] for i in range(n_layers - 1)]      # (2H,4H)
        bs = [param_refs[2 * i + 1][...] for i in range(n_layers - 1)]  # (1,4H)
        skip_w = param_refs[n_param - 2][...]         # (1, H)  pre-transposed
        skip_b = param_refs[n_param - 1][...]         # (1, 1)

        # ---- initial state (default init_states=None path) ----
        h = [jnp.zeros((B, H), jnp.float32) for _ in range(n_layers)]
        c = [jnp.zeros((B, H), jnp.float32) for _ in range(n_layers)]
        u_prev = jnp.ones((B, 1), jnp.float32)

        def cell(A, h_old, c_old, u_b, one_minus_u_b):
            # Two full-lane EUP pushes instead of four lane-sparse ones.
            sig = jax.nn.sigmoid(A)
            th = jnp.tanh(A)
            i_t = sig[:, 0 * H:1 * H]
            f_t = sig[:, 1 * H:2 * H]
            o_t = sig[:, 3 * H:4 * H]
            g_t = th[:, 2 * H:3 * H]
            c_new = f_t * c_old + i_t * g_t
            h_new = u_b * (o_t * jnp.tanh(c_new)) + one_minus_u_b * h_old
            return h_new, c_new

        # T is a small static constant -> fully unrolled time loop.
        for t in range(T):
            u = jnp.round(u_prev)                     # BinaryFunction.forward
            u_b = jnp.broadcast_to(u, (B, H))         # hoisted broadcast
            one_minus_u_b = 1.0 - u_b

            # Layer 0: x_t @ U0 + b0 was precomputed in the wrapper.
            A0 = xw_ref[t] + jnp.dot(h[0], V0, preferred_element_type=jnp.float32)
            h[0], c[0] = cell(A0, h[0], c[0], u_b, one_minus_u_b)

            # Layers >= 1: fused [U;V] matmul on concat([h_{i-1}, h_i]).
            for i in range(1, n_layers):
                hin = jnp.concatenate([h[i - 1], h[i]], axis=-1)      # (B, 2H)
                A = (jnp.dot(hin, Ws[i - 1], preferred_element_type=jnp.float32)
                     + bs[i - 1])
                h[i], c[i] = cell(A, h[i], c[i], u_b, one_minus_u_b)

            # Skip gate update.
            cum_u = jax.nn.sigmoid(
                jnp.sum(c[n_layers - 1] * skip_w, axis=-1, keepdims=True) + skip_b)
            u_prev = (u * cum_u
                      + (1.0 - u) * (u_prev + jnp.minimum(cum_u, 1.0 - u_prev)))

            out_ref[t] = h[n_layers - 1]

        for i in range(n_layers):
            h_fin_ref[i] = h[i]
            c_fin_ref[i] = c[i]
        u_fin_ref[...] = u_prev

    return kernel


def skip_lstm_forward(x, params, n_layers, hidden_size):
    """x: (B, T, F) float32.  params: flat list [U0,V0,b0, U1,V1,b1, ..., skip_w, skip_b]."""
    B, T, F = x.shape
    H = hidden_size

    U0, V0, b0 = params[0], params[1], params[2]
    x_tm = jnp.transpose(x, (1, 0, 2))                       # (T, B, F) time-major
    # Hoisted layer-0 input projection: one batched matmul for all timesteps.
    xw0 = jnp.einsum('tbf,fg->tbg', x_tm, U0) + b0           # (T, B, 4H)

    kernel_args = [xw0, V0]
    for i in range(1, n_layers):
        U, V, b = params[3 * i], params[3 * i + 1], params[3 * i + 2]
        kernel_args.append(jnp.concatenate([U, V], axis=0))  # fused (2H, 4H)
        kernel_args.append(b)                                # (1, 4H)
    skip_w, skip_b = params[-2], params[-1]
    kernel_args.append(jnp.transpose(skip_w))                # (1, H)
    kernel_args.append(skip_b)                               # (1, 1)

    kernel = make_skip_lstm_kernel(n_layers, H, B, T)

    out_shape = (
        jax.ShapeDtypeStruct((T, B, H), jnp.float32),          # output (time major)
        jax.ShapeDtypeStruct((n_layers, B, H), jnp.float32),   # final h
        jax.ShapeDtypeStruct((n_layers, B, H), jnp.float32),   # final c
        jax.ShapeDtypeStruct((B, 1), jnp.float32),             # final u_t
    )

    # No grid: everything fits trivially in VMEM on v5e/v6e/v7x; full-array
    # default blocks, single HBM<->VMEM DMA per operand, no per-step pipeline
    # bookkeeping.
    out_tm, h_fin, c_fin, u_fin = pl.pallas_call(
        kernel,
        out_shape=out_shape,
    )(*kernel_args)

    output = jnp.transpose(out_tm, (1, 0, 2))                # back to (B, T, H)
    return output, (h_fin, c_fin, u_fin)


def init_params(key, input_size, hidden_size, n_layers):
    """Deterministic parameter init mirroring the PyTorch module's __init__."""
    H = hidden_size
    params = []
    in_sizes = [input_size] + [H] * (n_layers - 1)
    for ins in in_sizes:
        stdv = 1.0 / math.sqrt(H)
        key, k1, k2, k3 = jax.random.split(key, 4)
        U = jax.random.uniform(k1, (ins, 4 * H), jnp.float32, -stdv, stdv)
        V = jax.random.uniform(k2, (H, 4 * H), jnp.float32, -stdv, stdv)
        b = jax.random.uniform(k3, (1, 4 * H), jnp.float32, -stdv, stdv)
        params += [U, V, b]
    # skip_w: xavier_uniform on (H, 1); skip_b: ones
    key, kw = jax.random.split(key)
    bound = math.sqrt(6.0 / (H + 1))
    skip_w = jax.random.uniform(kw, (H, 1), jnp.float32, -bound, bound)
    skip_b = jnp.ones((1, 1), jnp.float32)
    params += [skip_w, skip_b]
    return params


def skip_lstm_reference(x, params, n_layers, hidden_size):
    """Pure-JAX reference matching the PyTorch forward (training / batch!=1 path)."""
    B, T, F = x.shape
    H = hidden_size
    h = [jnp.zeros((B, H), jnp.float32) for _ in range(n_layers)]
    c = [jnp.zeros((B, H), jnp.float32) for _ in range(n_layers)]
    u_t = jnp.ones((B, 1), jnp.float32)
    skip_w, skip_b = params[-2], params[-1]
    outs = []
    for t in range(T):
        x_t = x[:, t, :]
        u = jnp.round(u_t)
        inp = x_t
        for i in range(n_layers):
            U, V, b = params[3 * i], params[3 * i + 1], params[3 * i + 2]
            A = inp @ U + h[i] @ V + b
            i_t = jax.nn.sigmoid(A[:, :H])
            f_t = jax.nn.sigmoid(A[:, H:2 * H])
            g_t = jnp.tanh(A[:, 2 * H:3 * H])
            o_t = jax.nn.sigmoid(A[:, 3 * H:])
            c[i] = f_t * c[i] + i_t * g_t
            h[i] = u * (o_t * jnp.tanh(c[i])) + (1.0 - u) * h[i]
            inp = h[i]
        cum_u = jax.nn.sigmoid(c[-1] @ skip_w + skip_b)
        u_t = u * cum_u + (1.0 - u) * (u_t + jnp.minimum(cum_u, 1.0 - u_t))
        outs.append(h[-1][None])
    output = jnp.concatenate(outs, axis=0).transpose(1, 0, 2)
    return output, (jnp.stack(h), jnp.stack(c), u_t)


if __name__ == "__main__":
    B, T, F, H, NL = 2, 8, 16, 32, 2

    key = jax.random.PRNGKey(0)
    key, kx, kp = jax.random.split(key, 3)
    x = jax.random.normal(kx, (B, T, F), jnp.float32)
    params = init_params(kp, F, H, NL)

    out, (h_fin, c_fin, u_fin) = skip_lstm_forward(x, params, NL, H)
    out = jax.block_until_ready(out)
    h_fin = jax.block_until_ready(h_fin)
    c_fin = jax.block_until_ready(c_fin)
    u_fin = jax.block_until_ready(u_fin)

    ref_out, (ref_h, ref_c, ref_u) = skip_lstm_reference(x, params, NL, H)

    assert np.allclose(np.asarray(out), np.asarray(ref_out), atol=1e-5, rtol=1e-5)
    assert np.allclose(np.asarray(h_fin), np.asarray(ref_h), atol=1e-5, rtol=1e-5)
    assert np.allclose(np.asarray(c_fin), np.asarray(ref_c), atol=1e-5, rtol=1e-5)
    assert np.allclose(np.asarray(u_fin), np.asarray(ref_u), atol=1e-5, rtol=1e-5)

    print("KERNEL_OK")
</pallas_src>

<mosaic_0001>
module attributes {stable_mosaic.version = 11 : i64} {
  func.func @kernel(%arg0: memref<8x2x128xf32, #tpu.memory_space<vmem>>, %arg1: memref<32x128xf32, #tpu.memory_space<vmem>>, %arg2: memref<64x128xf32, #tpu.memory_space<vmem>>, %arg3: memref<1x128xf32, #tpu.memory_space<vmem>>, %arg4: memref<1x32xf32, #tpu.memory_space<vmem>>, %arg5: memref<1x1xf32, #tpu.memory_space<vmem>>, %arg6: memref<8x2x32xf32, #tpu.memory_space<vmem>>, %arg7: memref<2x2x32xf32, #tpu.memory_space<vmem>>, %arg8: memref<2x2x32xf32, #tpu.memory_space<vmem>>, %arg9: memref<2x1xf32, #tpu.memory_space<vmem>>) attributes {dimension_semantics = [], scalar_prefetch = 0 : i64, scratch_operands = 0 : i64, tpu.core_type = #tpu.core_type<tc>} {
    %c0 = arith.constant 0 : index
    %c0_0 = arith.constant 0 : index
    %0 = vector.load %arg1[%c0, %c0_0] : memref<32x128xf32, #tpu.memory_space<vmem>>, vector<32x128xf32>
    %c0_1 = arith.constant 0 : index
    %c0_2 = arith.constant 0 : index
    %1 = vector.load %arg2[%c0_1, %c0_2] : memref<64x128xf32, #tpu.memory_space<vmem>>, vector<64x128xf32>
    %c0_3 = arith.constant 0 : index
    %c0_4 = arith.constant 0 : index
    %2 = vector.load %arg3[%c0_3, %c0_4] : memref<1x128xf32, #tpu.memory_space<vmem>>, vector<1x128xf32>
    %c0_5 = arith.constant 0 : index
    %c0_6 = arith.constant 0 : index
    %3 = vector.load %arg4[%c0_5, %c0_6] : memref<1x32xf32, #tpu.memory_space<vmem>>, vector<1x32xf32>
    %c0_7 = arith.constant 0 : index
    %c0_8 = arith.constant 0 : index
    %4 = vector.load %arg5[%c0_7, %c0_8] : memref<1x1xf32, #tpu.memory_space<vmem>>, vector<1x1xf32>
    %cst = arith.constant 0.000000e+00 : f32
    %5 = vector.broadcast %cst : f32 to vector<2x32xf32>
    %cst_9 = arith.constant 0.000000e+00 : f32
    %6 = vector.broadcast %cst_9 : f32 to vector<2x32xf32>
    %cst_10 = arith.constant 0.000000e+00 : f32
    %7 = vector.broadcast %cst_10 : f32 to vector<2x32xf32>
    %cst_11 = arith.constant 0.000000e+00 : f32
    %8 = vector.broadcast %cst_11 : f32 to vector<2x32xf32>
    %cst_12 = arith.constant 1.000000e+00 : f32
    %9 = vector.broadcast %cst_12 : f32 to vector<2x1xf32>
    %10 = math.roundeven %9 : vector<2x1xf32>
    %11 = vector.shape_cast %10 : vector<2x1xf32> to vector<2x1xf32>
    %12 = vector.broadcast %11 : vector<2x1xf32> to vector<2x32xf32>
    %cst_13 = arith.constant 1.000000e+00 : f32
    %13 = vector.broadcast %cst_13 : f32 to vector<2x32xf32>
    %14 = arith.subf %13, %12 : vector<2x32xf32>
    %c0_14 = arith.constant 0 : index
    %c0_15 = arith.constant 0 : index
    %c0_16 = arith.constant 0 : index
    %15 = vector.load %arg0[%c0_14, %c0_15, %c0_16] : memref<8x2x128xf32, #tpu.memory_space<vmem>>, vector<1x2x128xf32>
    %16 = vector.shape_cast %15 : vector<1x2x128xf32> to vector<2x128xf32>
    %cst_17 = arith.constant dense<0.000000e+00> : vector<2x128xf32>
    %17 = tpu.matmul %5, %0, %cst_17 {dimension_numbers = #tpu.dot_dimension_numbers<[1], [0], [0], [1], [0, 0, 1, 1], [], []>} : vector<2x32xf32>, vector<32x128xf32>, vector<2x128xf32> -> vector<2x128xf32>
    %18 = arith.addf %16, %17 : vector<2x128xf32>
    %19 = arith.negf %18 : vector<2x128xf32>
    %20 = math.exp %19 : vector<2x128xf32>
    %cst_18 = arith.constant 1.000000e+00 : f32
    %21 = vector.broadcast %cst_18 : f32 to vector<2x128xf32>
    %22 = arith.addf %21, %20 : vector<2x128xf32>
    %23 = arith.divf %21, %22 : vector<2x128xf32>
    %24 = math.tanh %18 : vector<2x128xf32>
    %25 = vector.extract_strided_slice %23 {offsets = [0, 0], sizes = [2, 32], strides = [1, 1]} : vector<2x128xf32> to vector<2x32xf32>
    %26 = vector.extract_strided_slice %23 {offsets = [0, 32], sizes = [2, 32], strides = [1, 1]} : vector<2x128xf32> to vector<2x32xf32>
    %27 = vector.extract_strided_slice %23 {offsets = [0, 96], sizes = [2, 32], strides = [1, 1]} : vector<2x128xf32> to vector<2x32xf32>
    %28 = vector.extract_strided_slice %24 {offsets = [0, 64], sizes = [2, 32], strides = [1, 1]} : vector<2x128xf32> to vector<2x32xf32>
    %29 = arith.mulf %26, %7 : vector<2x32xf32>
    %30 = arith.mulf %25, %28 : vector<2x32xf32>
    %31 = arith.addf %29, %30 : vector<2x32xf32>
    %32 = math.tanh %31 : vector<2x32xf32>
    %33 = arith.mulf %27, %32 : vector<2x32xf32>
    %34 = arith.mulf %12, %33 : vector<2x32xf32>
    %35 = arith.mulf %14, %5 : vector<2x32xf32>
    %36 = arith.addf %34, %35 : vector<2x32xf32>
    %37 = tpu.concatenate %36, %6 in 1 : vector<2x32xf32>, vector<2x32xf32> -> vector<2x64xf32>
    %cst_19 = arith.constant dense<0.000000e+00> : vector<2x128xf32>
    %38 = tpu.matmul %37, %1, %cst_19 {dimension_numbers = #tpu.dot_dimension_numbers<[1], [0], [0], [1], [0, 0, 1, 1], [], []>} : vector<2x64xf32>, vector<64x128xf32>, vector<2x128xf32> -> vector<2x128xf32>
    %39 = vector.broadcast %2 : vector<1x128xf32> to vector<2x128xf32>
    %40 = arith.addf %38, %39 : vector<2x128xf32>
    %41 = arith.negf %40 : vector<2x128xf32>
    %42 = math.exp %41 : vector<2x128xf32>
    %cst_20 = arith.constant 1.000000e+00 : f32
    %43 = vector.broadcast %cst_20 : f32 to vector<2x128xf32>
    %44 = arith.addf %43, %42 : vector<2x128xf32>
    %45 = arith.divf %43, %44 : vector<2x128xf32>
    %46 = math.tanh %40 : vector<2x128xf32>
    %47 = vector.extract_strided_slice %45 {offsets = [0, 0], sizes = [2, 32], strides = [1, 1]} : vector<2x128xf32> to vector<2x32xf32>
    %48 = vector.extract_strided_slice %45 {offsets = [0, 32], sizes = [2, 32], strides = [1, 1]} : vector<2x128xf32> to vector<2x32xf32>
    %49 = vector.extract_strided_slice %45 {offsets = [0, 96], sizes = [2, 32], strides = [1, 1]} : vector<2x128xf32> to vector<2x32xf32>
    %50 = vector.extract_strided_slice %46 {offsets = [0, 64], sizes = [2, 32], strides = [1, 1]} : vector<2x128xf32> to vector<2x32xf32>
    %51 = arith.mulf %48, %8 : vector<2x32xf32>
    %52 = arith.mulf %47, %50 : vector<2x32xf32>
    %53 = arith.addf %51, %52 : vector<2x32xf32>
    %54 = math.tanh %53 : vector<2x32xf32>
    %55 = arith.mulf %49, %54 : vector<2x32xf32>
    %56 = arith.mulf %12, %55 : vector<2x32xf32>
    %57 = arith.mulf %14, %6 : vector<2x32xf32>
    %58 = arith.addf %56, %57 : vector<2x32xf32>
    %59 = vector.broadcast %3 : vector<1x32xf32> to vector<2x32xf32>
    %60 = arith.mulf %53, %59 : vector<2x32xf32>
    %cst_21 = arith.constant dense<0.000000e+00> : vector<2xf32>
    %61 = vector.multi_reduction <add>, %60, %cst_21 [1] : vector<2x32xf32> to vector<2xf32>
    %62 = vector.shape_cast %61 : vector<2xf32> to vector<2x1xf32>
    %63 = vector.broadcast %4 : vector<1x1xf32> to vector<2x1xf32>
    %64 = arith.addf %62, %63 : vector<2x1xf32>
    %65 = arith.negf %64 : vector<2x1xf32>
    %66 = math.exp %65 : vector<2x1xf32>
    %cst_22 = arith.constant 1.000000e+00 : f32
    %67 = vector.broadcast %cst_22 : f32 to vector<2x1xf32>
    %68 = arith.addf %67, %66 : vector<2x1xf32>
    %69 = arith.divf %67, %68 : vector<2x1xf32>
    %70 = arith.mulf %10, %69 : vector<2x1xf32>
    %cst_23 = arith.constant 1.000000e+00 : f32
    %71 = vector.broadcast %cst_23 : f32 to vector<2x1xf32>
    %72 = arith.subf %71, %10 : vector<2x1xf32>
    %cst_24 = arith.constant 1.000000e+00 : f32
    %73 = vector.broadcast %cst_24 : f32 to vector<2x1xf32>
    %74 = arith.subf %73, %9 : vector<2x1xf32>
    %75 = arith.minimumf %69, %74 : vector<2x1xf32>
    %76 = arith.addf %9, %75 : vector<2x1xf32>
    %77 = arith.mulf %72, %76 : vector<2x1xf32>
    %78 = arith.addf %70, %77 : vector<2x1xf32>
    %c0_25 = arith.constant 0 : index
    %c0_26 = arith.constant 0 : index
    %c0_27 = arith.constant 0 : index
    %79 = vector.load %arg6[%c0_25, %c0_26, %c0_27] : memref<8x2x32xf32, #tpu.memory_space<vmem>>, vector<1x2x32xf32>
    %80 = vector.shape_cast %79 : vector<1x2x32xf32> to vector<2x32xf32>
    %81 = vector.shape_cast %58 : vector<2x32xf32> to vector<1x2x32xf32>
    tpu.vector_store %arg6[%c0_25, %c0_26, %c0_27], %81 {strides = array<i32>} : memref<8x2x32xf32, #tpu.memory_space<vmem>>, vector<1x2x32xf32>,
    %82 = math.roundeven %78 : vector<2x1xf32>
    %83 = vector.shape_cast %82 : vector<2x1xf32> to vector<2x1xf32>
    %84 = vector.broadcast %83 : vector<2x1xf32> to vector<2x32xf32>
    %cst_28 = arith.constant 1.000000e+00 : f32
    %85 = vector.broadcast %cst_28 : f32 to vector<2x32xf32>
    %86 = arith.subf %85, %84 : vector<2x32xf32>
    %c1 = arith.constant 1 : index
    %c0_29 = arith.constant 0 : index
    %c0_30 = arith.constant 0 : index
    %87 = vector.load %arg0[%c1, %c0_29, %c0_30] : memref<8x2x128xf32, #tpu.memory_space<vmem>>, vector<1x2x128xf32>
    %88 = vector.shape_cast %87 : vector<1x2x128xf32> to vector<2x128xf32>
    %cst_31 = arith.constant dense<0.000000e+00> : vector<2x128xf32>
    %89 = tpu.matmul %36, %0, %cst_31 {dimension_numbers = #tpu.dot_dimension_numbers<[1], [0], [0], [1], [0, 0, 1, 1], [], []>} : vector<2x32xf32>, vector<32x128xf32>, vector<2x128xf32> -> vector<2x128xf32>
    %90 = arith.addf %88, %89 : vector<2x128xf32>
    %91 = arith.negf %90 : vector<2x128xf32>
    %92 = math.exp %91 : vector<2x128xf32>
    %cst_32 = arith.constant 1.000000e+00 : f32
    %93 = vector.broadcast %cst_32 : f32 to vector<2x128xf32>
    %94 = arith.addf %93, %92 : vector<2x128xf32>
    %95 = arith.divf %93, %94 : vector<2x128xf32>
    %96 = math.tanh %90 : vector<2x128xf32>
    %97 = vector.extract_strided_slice %95 {offsets = [0, 0], sizes = [2, 32], strides = [1, 1]} : vector<2x128xf32> to vector<2x32xf32>
    %98 = vector.extract_strided_slice %95 {offsets = [0, 32], sizes = [2, 32], strides = [1, 1]} : vector<2x128xf32> to vector<2x32xf32>
    %99 = vector.extract_strided_slice %95 {offsets = [0, 96], sizes = [2, 32], strides = [1, 1]} : vector<2x128xf32> to vector<2x32xf32>
    %100 = vector.extract_strided_slice %96 {offsets = [0, 64], sizes = [2, 32], strides = [1, 1]} : vector<2x128xf32> to vector<2x32xf32>
    %101 = arith.mulf %98, %31 : vector<2x32xf32>
    %102 = arith.mulf %97, %100 : vector<2x32xf32>
    %103 = arith.addf %101, %102 : vector<2x32xf32>
    %104 = math.tanh %103 : vector<2x32xf32>
    %105 = arith.mulf %99, %104 : vector<2x32xf32>
    %106 = arith.mulf %84, %105 : vector<2x32xf32>
    %107 = arith.mulf %86, %36 : vector<2x32xf32>
    %108 = arith.addf %106, %107 : vector<2x32xf32>
    %109 = tpu.concatenate %108, %58 in 1 : vector<2x32xf32>, vector<2x32xf32> -> vector<2x64xf32>
    %cst_33 = arith.constant dense<0.000000e+00> : vector<2x128xf32>
    %110 = tpu.matmul %109, %1, %cst_33 {dimension_numbers = #tpu.dot_dimension_numbers<[1], [0], [0], [1], [0, 0, 1, 1], [], []>} : vector<2x64xf32>, vector<64x128xf32>, vector<2x128xf32> -> vector<2x128xf32>
    %111 = vector.broadcast %2 : vector<1x128xf32> to vector<2x128xf32>
    %112 = arith.addf %110, %111 : vector<2x128xf32>
    %113 = arith.negf %112 : vector<2x128xf32>
    %114 = math.exp %113 : vector<2x128xf32>
    %cst_34 = arith.constant 1.000000e+00 : f32
    %115 = vector.broadcast %cst_34 : f32 to vector<2x128xf32>
    %116 = arith.addf %115, %114 : vector<2x128xf32>
    %117 = arith.divf %115, %116 : vector<2x128xf32>
    %118 = math.tanh %112 : vector<2x128xf32>
    %119 = vector.extract_strided_slice %117 {offsets = [0, 0], sizes = [2, 32], strides = [1, 1]} : vector<2x128xf32> to vector<2x32xf32>
    %120 = vector.extract_strided_slice %117 {offsets = [0, 32], sizes = [2, 32], strides = [1, 1]} : vector<2x128xf32> to vector<2x32xf32>
    %121 = vector.extract_strided_slice %117 {offsets = [0, 96], sizes = [2, 32], strides = [1, 1]} : vector<2x128xf32> to vector<2x32xf32>
    %122 = vector.extract_strided_slice %118 {offsets = [0, 64], sizes = [2, 32], strides = [1, 1]} : vector<2x128xf32> to vector<2x32xf32>
    %123 = arith.mulf %120, %53 : vector<2x32xf32>
    %124 = arith.mulf %119, %122 : vector<2x32xf32>
    %125 = arith.addf %123, %124 : vector<2x32xf32>
    %126 = math.tanh %125 : vector<2x32xf32>
    %127 = arith.mulf %121, %126 : vector<2x32xf32>
    %128 = arith.mulf %84, %127 : vector<2x32xf32>
    %129 = arith.mulf %86, %58 : vector<2x32xf32>
    %130 = arith.addf %128, %129 : vector<2x32xf32>
    %131 = vector.broadcast %3 : vector<1x32xf32> to vector<2x32xf32>
    %132 = arith.mulf %125, %131 : vector<2x32xf32>
    %cst_35 = arith.constant dense<0.000000e+00> : vector<2xf32>
    %133 = vector.multi_reduction <add>, %132, %cst_35 [1] : vector<2x32xf32> to vector<2xf32>
    %134 = vector.shape_cast %133 : vector<2xf32> to vector<2x1xf32>
    %135 = vector.broadcast %4 : vector<1x1xf32> to vector<2x1xf32>
    %136 = arith.addf %134, %135 : vector<2x1xf32>
    %137 = arith.negf %136 : vector<2x1xf32>
    %138 = math.exp %137 : vector<2x1xf32>
    %cst_36 = arith.constant 1.000000e+00 : f32
    %139 = vector.broadcast %cst_36 : f32 to vector<2x1xf32>
    %140 = arith.addf %139, %138 : vector<2x1xf32>
    %141 = arith.divf %139, %140 : vector<2x1xf32>
    %142 = arith.mulf %82, %141 : vector<2x1xf32>
    %cst_37 = arith.constant 1.000000e+00 : f32
    %143 = vector.broadcast %cst_37 : f32 to vector<2x1xf32>
    %144 = arith.subf %143, %82 : vector<2x1xf32>
    %cst_38 = arith.constant 1.000000e+00 : f32
    %145 = vector.broadcast %cst_38 : f32 to vector<2x1xf32>
    %146 = arith.subf %145, %78 : vector<2x1xf32>
    %147 = arith.minimumf %141, %146 : vector<2x1xf32>
    %148 = arith.addf %78, %147 : vector<2x1xf32>
    %149 = arith.mulf %144, %148 : vector<2x1xf32>
    %150 = arith.addf %142, %149 : vector<2x1xf32>
    %c1_39 = arith.constant 1 : index
    %c0_40 = arith.constant 0 : index
    %c0_41 = arith.constant 0 : index
    %151 = vector.load %arg6[%c1_39, %c0_40, %c0_41] : memref<8x2x32xf32, #tpu.memory_space<vmem>>, vector<1x2x32xf32>
    %152 = vector.shape_cast %151 : vector<1x2x32xf32> to vector<2x32xf32>
    %153 = vector.shape_cast %130 : vector<2x32xf32> to vector<1x2x32xf32>
    tpu.vector_store %arg6[%c1_39, %c0_40, %c0_41], %153 {strides = array<i32>} : memref<8x2x32xf32, #tpu.memory_space<vmem>>, vector<1x2x32xf32>,
    %154 = math.roundeven %150 : vector<2x1xf32>
    %155 = vector.shape_cast %154 : vector<2x1xf32> to vector<2x1xf32>
    %156 = vector.broadcast %155 : vector<2x1xf32> to vector<2x32xf32>
    %cst_42 = arith.constant 1.000000e+00 : f32
    %157 = vector.broadcast %cst_42 : f32 to vector<2x32xf32>
    %158 = arith.subf %157, %156 : vector<2x32xf32>
    %c2 = arith.constant 2 : index
    %c0_43 = arith.constant 0 : index
    %c0_44 = arith.constant 0 : index
    %159 = vector.load %arg0[%c2, %c0_43, %c0_44] : memref<8x2x128xf32, #tpu.memory_space<vmem>>, vector<1x2x128xf32>
    %160 = vector.shape_cast %159 : vector<1x2x128xf32> to vector<2x128xf32>
    %cst_45 = arith.constant dense<0.000000e+00> : vector<2x128xf32>
    %161 = tpu.matmul %108, %0, %cst_45 {dimension_numbers = #tpu.dot_dimension_numbers<[1], [0], [0], [1], [0, 0, 1, 1], [], []>} : vector<2x32xf32>, vector<32x128xf32>, vector<2x128xf32> -> vector<2x128xf32>
    %162 = arith.addf %160, %161 : vector<2x128xf32>
    %163 = arith.negf %162 : vector<2x128xf32>
    %164 = math.exp %163 : vector<2x128xf32>
    %cst_46 = arith.constant 1.000000e+00 : f32
    %165 = vector.broadcast %cst_46 : f32 to vector<2x128xf32>
    %166 = arith.addf %165, %164 : vector<2x128xf32>
    %167 = arith.divf %165, %166 : vector<2x128xf32>
    %168 = math.tanh %162 : vector<2x128xf32>
    %169 = vector.extract_strided_slice %167 {offsets = [0, 0], sizes = [2, 32], strides = [1, 1]} : vector<2x128xf32> to vector<2x32xf32>
    %170 = vector.extract_strided_slice %167 {offsets = [0, 32], sizes = [2, 32], strides = [1, 1]} : vector<2x128xf32> to vector<2x32xf32>
    %171 = vector.extract_strided_slice %167 {offsets = [0, 96], sizes = [2, 32], strides = [1, 1]} : vector<2x128xf32> to vector<2x32xf32>
    %172 = vector.extract_strided_slice %168 {offsets = [0, 64], sizes = [2, 32], strides = [1, 1]} : vector<2x128xf32> to vector<2x32xf32>
    %173 = arith.mulf %170, %103 : vector<2x32xf32>
    %174 = arith.mulf %169, %172 : vector<2x32xf32>
    %175 = arith.addf %173, %174 : vector<2x32xf32>
    %176 = math.tanh %175 : vector<2x32xf32>
    %177 = arith.mulf %171, %176 : vector<2x32xf32>
    %178 = arith.mulf %156, %177 : vector<2x32xf32>
    %179 = arith.mulf %158, %108 : vector<2x32xf32>
    %180 = arith.addf %178, %179 : vector<2x32xf32>
    %181 = tpu.concatenate %180, %130 in 1 : vector<2x32xf32>, vector<2x32xf32> -> vector<2x64xf32>
    %cst_47 = arith.constant dense<0.000000e+00> : vector<2x128xf32>
    %182 = tpu.matmul %181, %1, %cst_47 {dimension_numbers = #tpu.dot_dimension_numbers<[1], [0], [0], [1], [0, 0, 1, 1], [], []>} : vector<2x64xf32>, vector<64x128xf32>, vector<2x128xf32> -> vector<2x128xf32>
    %183 = vector.broadcast %2 : vector<1x128xf32> to vector<2x128xf32>
    %184 = arith.addf %182, %183 : vector<2x128xf32>
    %185 = arith.negf %184 : vector<2x128xf32>
    %186 = math.exp %185 : vector<2x128xf32>
    %cst_48 = arith.constant 1.000000e+00 : f32
    %187 = vector.broadcast %cst_48 : f32 to vector<2x128xf32>
    %188 = arith.addf %187, %186 : vector<2x128xf32>
    %189 = arith.divf %187, %188 : vector<2x128xf32>
    %190 = math.tanh %184 : vector<2x128xf32>
    %191 = vector.extract_strided_slice %189 {offsets = [0, 0], sizes = [2, 32], strides = [1, 1]} : vector<2x128xf32> to vector<2x32xf32>
    %192 = vector.extract_strided_slice %189 {offsets = [0, 32], sizes = [2, 32], strides = [1, 1]} : vector<2x128xf32> to vector<2x32xf32>
    %193 = vector.extract_strided_slice %189 {offsets = [0, 96], sizes = [2, 32], strides = [1, 1]} : vector<2x128xf32> to vector<2x32xf32>
    %194 = vector.extract_strided_slice %190 {offsets = [0, 64], sizes = [2, 32], strides = [1, 1]} : vector<2x128xf32> to vector<2x32xf32>
    %195 = arith.mulf %192, %125 : vector<2x32xf32>
    %196 = arith.mulf %191, %194 : vector<2x32xf32>
    %197 = arith.addf %195, %196 : vector<2x32xf32>
    %198 = math.tanh %197 : vector<2x32xf32>
    %199 = arith.mulf %193, %198 : vector<2x32xf32>
    %200 = arith.mulf %156, %199 : vector<2x32xf32>
    %201 = arith.mulf %158, %130 : vector<2x32xf32>
    %202 = arith.addf %200, %201 : vector<2x32xf32>
    %203 = vector.broadcast %3 : vector<1x32xf32> to vector<2x32xf32>
    %204 = arith.mulf %197, %203 : vector<2x32xf32>
    %cst_49 = arith.constant dense<0.000000e+00> : vector<2xf32>
    %205 = vector.multi_reduction <add>, %204, %cst_49 [1] : vector<2x32xf32> to vector<2xf32>
    %206 = vector.shape_cast %205 : vector<2xf32> to vector<2x1xf32>
    %207 = vector.broadcast %4 : vector<1x1xf32> to vector<2x1xf32>
    %208 = arith.addf %206, %207 : vector<2x1xf32>
    %209 = arith.negf %208 : vector<2x1xf32>
    %210 = math.exp %209 : vector<2x1xf32>
    %cst_50 = arith.constant 1.000000e+00 : f32
    %211 = vector.broadcast %cst_50 : f32 to vector<2x1xf32>
    %212 = arith.addf %211, %210 : vector<2x1xf32>
    %213 = arith.divf %211, %212 : vector<2x1xf32>
    %214 = arith.mulf %154, %213 : vector<2x1xf32>
    %cst_51 = arith.constant 1.000000e+00 : f32
    %215 = vector.broadcast %cst_51 : f32 to vector<2x1xf32>
    %216 = arith.subf %215, %154 : vector<2x1xf32>
    %cst_52 = arith.constant 1.000000e+00 : f32
    %217 = vector.broadcast %cst_52 : f32 to vector<2x1xf32>
    %218 = arith.subf %217, %150 : vector<2x1xf32>
    %219 = arith.minimumf %213, %218 : vector<2x1xf32>
    %220 = arith.addf %150, %219 : vector<2x1xf32>
    %221 = arith.mulf %216, %220 : vector<2x1xf32>
    %222 = arith.addf %214, %221 : vector<2x1xf32>
    %c2_53 = arith.constant 2 : index
    %c0_54 = arith.constant 0 : index
    %c0_55 = arith.constant 0 : index
    %223 = vector.load %arg6[%c2_53, %c0_54, %c0_55] : memref<8x2x32xf32, #tpu.memory_space<vmem>>, vector<1x2x32xf32>
    %224 = vector.shape_cast %223 : vector<1x2x32xf32> to vector<2x32xf32>
    %225 = vector.shape_cast %202 : vector<2x32xf32> to vector<1x2x32xf32>
    tpu.vector_store %arg6[%c2_53, %c0_54, %c0_55], %225 {strides = array<i32>} : memref<8x2x32xf32, #tpu.memory_space<vmem>>, vector<1x2x32xf32>,
    %226 = math.roundeven %222 : vector<2x1xf32>
    %227 = vector.shape_cast %226 : vector<2x1xf32> to vector<2x1xf32>
    %228 = vector.broadcast %227 : vector<2x1xf32> to vector<2x32xf32>
    %cst_56 = arith.constant 1.000000e+00 : f32
    %229 = vector.broadcast %cst_56 : f32 to vector<2x32xf32>
    %230 = arith.subf %229, %228 : vector<2x32xf32>
    %c3 = arith.constant 3 : index
    %c0_57 = arith.constant 0 : index
    %c0_58 = arith.constant 0 : index
    %231 = vector.load %arg0[%c3, %c0_57, %c0_58] : memref<8x2x128xf32, #tpu.memory_space<vmem>>, vector<1x2x128xf32>
    %232 = vector.shape_cast %231 : vector<1x2x128xf32> to vector<2x128xf32>
    %cst_59 = arith.constant dense<0.000000e+00> : vector<2x128xf32>
    %233 = tpu.matmul %180, %0, %cst_59 {dimension_numbers = #tpu.dot_dimension_numbers<[1], [0], [0], [1], [0, 0, 1, 1], [], []>} : vector<2x32xf32>, vector<32x128xf32>, vector<2x128xf32> -> vector<2x128xf32>
    %234 = arith.addf %232, %233 : vector<2x128xf32>
    %235 = arith.negf %234 : vector<2x128xf32>
    %236 = math.exp %235 : vector<2x128xf32>
    %cst_60 = arith.constant 1.000000e+00 : f32
    %237 = vector.broadcast %cst_60 : f32 to vector<2x128xf32>
    %238 = arith.addf %237, %236 : vector<2x128xf32>
    %239 = arith.divf %237, %238 : vector<2x128xf32>
    %240 = math.tanh %234 : vector<2x128xf32>
    %241 = vector.extract_strided_slice %239 {offsets = [0, 0], sizes = [2, 32], strides = [1, 1]} : vector<2x128xf32> to vector<2x32xf32>
    %242 = vector.extract_strided_slice %239 {offsets = [0, 32], sizes = [2, 32], strides = [1, 1]} : vector<2x128xf32> to vector<2x32xf32>
    %243 = vector.extract_strided_slice %239 {offsets = [0, 96], sizes = [2, 32], strides = [1, 1]} : vector<2x128xf32> to vector<2x32xf32>
    %244 = vector.extract_strided_slice %240 {offsets = [0, 64], sizes = [2, 32], strides = [1, 1]} : vector<2x128xf32> to vector<2x32xf32>
    %245 = arith.mulf %242, %175 : vector<2x32xf32>
    %246 = arith.mulf %241, %244 : vector<2x32xf32>
    %247 = arith.addf %245, %246 : vector<2x32xf32>
    %248 = math.tanh %247 : vector<2x32xf32>
    %249 = arith.mulf %243, %248 : vector<2x32xf32>
    %250 = arith.mulf %228, %249 : vector<2x32xf32>
    %251 = arith.mulf %230, %180 : vector<2x32xf32>
    %252 = arith.addf %250, %251 : vector<2x32xf32>
    %253 = tpu.concatenate %252, %202 in 1 : vector<2x32xf32>, vector<2x32xf32> -> vector<2x64xf32>
    %cst_61 = arith.constant dense<0.000000e+00> : vector<2x128xf32>
    %254 = tpu.matmul %253, %1, %cst_61 {dimension_numbers = #tpu.dot_dimension_numbers<[1], [0], [0], [1], [0, 0, 1, 1], [], []>} : vector<2x64xf32>, vector<64x128xf32>, vector<2x128xf32> -> vector<2x128xf32>
    %255 = vector.broadcast %2 : vector<1x128xf32> to vector<2x128xf32>
    %256 = arith.addf %254, %255 : vector<2x128xf32>
    %257 = arith.negf %256 : vector<2x128xf32>
    %258 = math.exp %257 : vector<2x128xf32>
    %cst_62 = arith.constant 1.000000e+00 : f32
    %259 = vector.broadcast %cst_62 : f32 to vector<2x128xf32>
    %260 = arith.addf %259, %258 : vector<2x128xf32>
    %261 = arith.divf %259, %260 : vector<2x128xf32>
    %262 = math.tanh %256 : vector<2x128xf32>
    %263 = vector.extract_strided_slice %261 {offsets = [0, 0], sizes = [2, 32], strides = [1, 1]} : vector<2x128xf32> to vector<2x32xf32>
    %264 = vector.extract_strided_slice %261 {offsets = [0, 32], sizes = [2, 32], strides = [1, 1]} : vector<2x128xf32> to vector<2x32xf32>
    %265 = vector.extract_strided_slice %261 {offsets = [0, 96], sizes = [2, 32], strides = [1, 1]} : vector<2x128xf32> to vector<2x32xf32>
    %266 = vector.extract_strided_slice %262 {offsets = [0, 64], sizes = [2, 32], strides = [1, 1]} : vector<2x128xf32> to vector<2x32xf32>
    %267 = arith.mulf %264, %197 : vector<2x32xf32>
    %268 = arith.mulf %263, %266 : vector<2x32xf32>
    %269 = arith.addf %267, %268 : vector<2x32xf32>
    %270 = math.tanh %269 : vector<2x32xf32>
    %271 = arith.mulf %265, %270 : vector<2x32xf32>
    %272 = arith.mulf %228, %271 : vector<2x32xf32>
    %273 = arith.mulf %230, %202 : vector<2x32xf32>
    %274 = arith.addf %272, %273 : vector<2x32xf32>
    %275 = vector.broadcast %3 : vector<1x32xf32> to vector<2x32xf32>
    %276 = arith.mulf %269, %275 : vector<2x32xf32>
    %cst_63 = arith.constant dense<0.000000e+00> : vector<2xf32>
    %277 = vector.multi_reduction <add>, %276, %cst_63 [1] : vector<2x32xf32> to vector<2xf32>
    %278 = vector.shape_cast %277 : vector<2xf32> to vector<2x1xf32>
    %279 = vector.broadcast %4 : vector<1x1xf32> to vector<2x1xf32>
    %280 = arith.addf %278, %279 : vector<2x1xf32>
    %281 = arith.negf %280 : vector<2x1xf32>
    %282 = math.exp %281 : vector<2x1xf32>
    %cst_64 = arith.constant 1.000000e+00 : f32
    %283 = vector.broadcast %cst_64 : f32 to vector<2x1xf32>
    %284 = arith.addf %283, %282 : vector<2x1xf32>
    %285 = arith.divf %283, %284 : vector<2x1xf32>
    %286 = arith.mulf %226, %285 : vector<2x1xf32>
    %cst_65 = arith.constant 1.000000e+00 : f32
    %287 = vector.broadcast %cst_65 : f32 to vector<2x1xf32>
    %288 = arith.subf %287, %226 : vector<2x1xf32>
    %cst_66 = arith.constant 1.000000e+00 : f32
    %289 = vector.broadcast %cst_66 : f32 to vector<2x1xf32>
    %290 = arith.subf %289, %222 : vector<2x1xf32>
    %291 = arith.minimumf %285, %290 : vector<2x1xf32>
    %292 = arith.addf %222, %291 : vector<2x1xf32>
    %293 = arith.mulf %288, %292 : vector<2x1xf32>
    %294 = arith.addf %286, %293 : vector<2x1xf32>
    %c3_67 = arith.constant 3 : index
    %c0_68 = arith.constant 0 : index
    %c0_69 = arith.constant 0 : index
    %295 = vector.load %arg6[%c3_67, %c0_68, %c0_69] : memref<8x2x32xf32, #tpu.memory_space<vmem>>, vector<1x2x32xf32>
    %296 = vector.shape_cast %295 : vector<1x2x32xf32> to vector<2x32xf32>
    %297 = vector.shape_cast %274 : vector<2x32xf32> to vector<1x2x32xf32>
    tpu.vector_store %arg6[%c3_67, %c0_68, %c0_69], %297 {strides = array<i32>} : memref<8x2x32xf32, #tpu.memory_space<vmem>>, vector<1x2x32xf32>,
    %298 = math.roundeven %294 : vector<2x1xf32>
    %299 = vector.shape_cast %298 : vector<2x1xf32> to vector<2x1xf32>
    %300 = vector.broadcast %299 : vector<2x1xf32> to vector<2x32xf32>
    %cst_70 = arith.constant 1.000000e+00 : f32
    %301 = vector.broadcast %cst_70 : f32 to vector<2x32xf32>
    %302 = arith.subf %301, %300 : vector<2x32xf32>
    %c4 = arith.constant 4 : index
    %c0_71 = arith.constant 0 : index
    %c0_72 = arith.constant 0 : index
    %303 = vector.load %arg0[%c4, %c0_71, %c0_72] : memref<8x2x128xf32, #tpu.memory_space<vmem>>, vector<1x2x128xf32>
    %304 = vector.shape_cast %303 : vector<1x2x128xf32> to vector<2x128xf32>
    %cst_73 = arith.constant dense<0.000000e+00> : vector<2x128xf32>
    %305 = tpu.matmul %252, %0, %cst_73 {dimension_numbers = #tpu.dot_dimension_numbers<[1], [0], [0], [1], [0, 0, 1, 1], [], []>} : vector<2x32xf32>, vector<32x128xf32>, vector<2x128xf32> -> vector<2x128xf32>
    %306 = arith.addf %304, %305 : vector<2x128xf32>
    %307 = arith.negf %306 : vector<2x128xf32>
    %308 = math.exp %307 : vector<2x128xf32>
    %cst_74 = arith.constant 1.000000e+00 : f32
    %309 = vector.broadcast %cst_74 : f32 to vector<2x128xf32>
    %310 = arith.addf %309, %308 : vector<2x128xf32>
    %311 = arith.divf %309, %310 : vector<2x128xf32>
    %312 = math.tanh %306 : vector<2x128xf32>
    %313 = vector.extract_strided_slice %311 {offsets = [0, 0], sizes = [2, 32], strides = [1, 1]} : vector<2x128xf32> to vector<2x32xf32>
    %314 = vector.extract_strided_slice %311 {offsets = [0, 32], sizes = [2, 32], strides = [1, 1]} : vector<2x128xf32> to vector<2x32xf32>
    %315 = vector.extract_strided_slice %311 {offsets = [0, 96], sizes = [2, 32], strides = [1, 1]} : vector<2x128xf32> to vector<2x32xf32>
    %316 = vector.extract_strided_slice %312 {offsets = [0, 64], sizes = [2, 32], strides = [1, 1]} : vector<2x128xf32> to vector<2x32xf32>
    %317 = arith.mulf %314, %247 : vector<2x32xf32>
    %318 = arith.mulf %313, %316 : vector<2x32xf32>
    %319 = arith.addf %317, %318 : vector<2x32xf32>
    %320 = math.tanh %319 : vector<2x32xf32>
    %321 = arith.mulf %315, %320 : vector<2x32xf32>
    %322 = arith.mulf %300, %321 : vector<2x32xf32>
    %323 = arith.mulf %302, %252 : vector<2x32xf32>
    %324 = arith.addf %322, %323 : vector<2x32xf32>
    %325 = tpu.concatenate %324, %274 in 1 : vector<2x32xf32>, vector<2x32xf32> -> vector<2x64xf32>
    %cst_75 = arith.constant dense<0.000000e+00> : vector<2x128xf32>
    %326 = tpu.matmul %325, %1, %cst_75 {dimension_numbers = #tpu.dot_dimension_numbers<[1], [0], [0], [1], [0, 0, 1, 1], [], []>} : vector<2x64xf32>, vector<64x128xf32>, vector<2x128xf32> -> vector<2x128xf32>
    %327 = vector.broadcast %2 : vector<1x128xf32> to vector<2x128xf32>
    %328 = arith.addf %326, %327 : vector<2x128xf32>
    %329 = arith.negf %328 : vector<2x128xf32>
    %330 = math.exp %329 : vector<2x128xf32>
    %cst_76 = arith.constant 1.000000e+00 : f32
    %331 = vector.broadcast %cst_76 : f32 to vector<2x128xf32>
    %332 = arith.addf %331, %330 : vector<2x128xf32>
    %333 = arith.divf %331, %332 : vector<2x128xf32>
    %334 = math.tanh %328 : vector<2x128xf32>
    %335 = vector.extract_strided_slice %333 {offsets = [0, 0], sizes = [2, 32], strides = [1, 1]} : vector<2x128xf32> to vector<2x32xf32>
    %336 = vector.extract_strided_slice %333 {offsets = [0, 32], sizes = [2, 32], strides = [1, 1]} : vector<2x128xf32> to vector<2x32xf32>
    %337 = vector.extract_strided_slice %333 {offsets = [0, 96], sizes = [2, 32], strides = [1, 1]} : vector<2x128xf32> to vector<2x32xf32>
    %338 = vector.extract_strided_slice %334 {offsets = [0, 64], sizes = [2, 32], strides = [1, 1]} : vector<2x128xf32> to vector<2x32xf32>
    %339 = arith.mulf %336, %269 : vector<2x32xf32>
    %340 = arith.mulf %335, %338 : vector<2x32xf32>
    %341 = arith.addf %339, %340 : vector<2x32xf32>
    %342 = math.tanh %341 : vector<2x32xf32>
    %343 = arith.mulf %337, %342 : vector<2x32xf32>
    %344 = arith.mulf %300, %343 : vector<2x32xf32>
    %345 = arith.mulf %302, %274 : vector<2x32xf32>
    %346 = arith.addf %344, %345 : vector<2x32xf32>
    %347 = vector.broadcast %3 : vector<1x32xf32> to vector<2x32xf32>
    %348 = arith.mulf %341, %347 : vector<2x32xf32>
    %cst_77 = arith.constant dense<0.000000e+00> : vector<2xf32>
    %349 = vector.multi_reduction <add>, %348, %cst_77 [1] : vector<2x32xf32> to vector<2xf32>
    %350 = vector.shape_cast %349 : vector<2xf32> to vector<2x1xf32>
    %351 = vector.broadcast %4 : vector<1x1xf32> to vector<2x1xf32>
    %352 = arith.addf %350, %351 : vector<2x1xf32>
    %353 = arith.negf %352 : vector<2x1xf32>
    %354 = math.exp %353 : vector<2x1xf32>
    %cst_78 = arith.constant 1.000000e+00 : f32
    %355 = vector.broadcast %cst_78 : f32 to vector<2x1xf32>
    %356 = arith.addf %355, %354 : vector<2x1xf32>
    %357 = arith.divf %355, %356 : vector<2x1xf32>
    %358 = arith.mulf %298, %357 : vector<2x1xf32>
    %cst_79 = arith.constant 1.000000e+00 : f32
    %359 = vector.broadcast %cst_79 : f32 to vector<2x1xf32>
    %360 = arith.subf %359, %298 : vector<2x1xf32>
    %cst_80 = arith.constant 1.000000e+00 : f32
    %361 = vector.broadcast %cst_80 : f32 to vector<2x1xf32>
    %362 = arith.subf %361, %294 : vector<2x1xf32>
    %363 = arith.minimumf %357, %362 : vector<2x1xf32>
    %364 = arith.addf %294, %363 : vector<2x1xf32>
    %365 = arith.mulf %360, %364 : vector<2x1xf32>
    %366 = arith.addf %358, %365 : vector<2x1xf32>
    %c4_81 = arith.constant 4 : index
    %c0_82 = arith.constant 0 : index
    %c0_83 = arith.constant 0 : index
    %367 = vector.load %arg6[%c4_81, %c0_82, %c0_83] : memref<8x2x32xf32, #tpu.memory_space<vmem>>, vector<1x2x32xf32>
    %368 = vector.shape_cast %367 : vector<1x2x32xf32> to vector<2x32xf32>
    %369 = vector.shape_cast %346 : vector<2x32xf32> to vector<1x2x32xf32>
    tpu.vector_store %arg6[%c4_81, %c0_82, %c0_83], %369 {strides = array<i32>} : memref<8x2x32xf32, #tpu.memory_space<vmem>>, vector<1x2x32xf32>,
    %370 = math.roundeven %366 : vector<2x1xf32>
    %371 = vector.shape_cast %370 : vector<2x1xf32> to vector<2x1xf32>
    %372 = vector.broadcast %371 : vector<2x1xf32> to vector<2x32xf32>
    %cst_84 = arith.constant 1.000000e+00 : f32
    %373 = vector.broadcast %cst_84 : f32 to vector<2x32xf32>
    %374 = arith.subf %373, %372 : vector<2x32xf32>
    %c5 = arith.constant 5 : index
    %c0_85 = arith.constant 0 : index
    %c0_86 = arith.constant 0 : index
    %375 = vector.load %arg0[%c5, %c0_85, %c0_86] : memref<8x2x128xf32, #tpu.memory_space<vmem>>, vector<1x2x128xf32>
    %376 = vector.shape_cast %375 : vector<1x2x128xf32> to vector<2x128xf32>
    %cst_87 = arith.constant dense<0.000000e+00> : vector<2x128xf32>
    %377 = tpu.matmul %324, %0, %cst_87 {dimension_numbers = #tpu.dot_dimension_numbers<[1], [0], [0], [1], [0, 0, 1, 1], [], []>} : vector<2x32xf32>, vector<32x128xf32>, vector<2x128xf32> -> vector<2x128xf32>
    %378 = arith.addf %376, %377 : vector<2x128xf32>
    %379 = arith.negf %378 : vector<2x128xf32>
    %380 = math.exp %379 : vector<2x128xf32>
    %cst_88 = arith.constant 1.000000e+00 : f32
    %381 = vector.broadcast %cst_88 : f32 to vector<2x128xf32>
    %382 = arith.addf %381, %380 : vector<2x128xf32>
    %383 = arith.divf %381, %382 : vector<2x128xf32>
    %384 = math.tanh %378 : vector<2x128xf32>
    %385 = vector.extract_strided_slice %383 {offsets = [0, 0], sizes = [2, 32], strides = [1, 1]} : vector<2x128xf32> to vector<2x32xf32>
    %386 = vector.extract_strided_slice %383 {offsets = [0, 32], sizes = [2, 32], strides = [1, 1]} : vector<2x128xf32> to vector<2x32xf32>
    %387 = vector.extract_strided_slice %383 {offsets = [0, 96], sizes = [2, 32], strides = [1, 1]} : vector<2x128xf32> to vector<2x32xf32>
    %388 = vector.extract_strided_slice %384 {offsets = [0, 64], sizes = [2, 32], strides = [1, 1]} : vector<2x128xf32> to vector<2x32xf32>
    %389 = arith.mulf %386, %319 : vector<2x32xf32>
    %390 = arith.mulf %385, %388 : vector<2x32xf32>
    %391 = arith.addf %389, %390 : vector<2x32xf32>
    %392 = math.tanh %391 : vector<2x32xf32>
    %393 = arith.mulf %387, %392 : vector<2x32xf32>
    %394 = arith.mulf %372, %393 : vector<2x32xf32>
    %395 = arith.mulf %374, %324 : vector<2x32xf32>
    %396 = arith.addf %394, %395 : vector<2x32xf32>
    %397 = tpu.concatenate %396, %346 in 1 : vector<2x32xf32>, vector<2x32xf32> -> vector<2x64xf32>
    %cst_89 = arith.constant dense<0.000000e+00> : vector<2x128xf32>
    %398 = tpu.matmul %397, %1, %cst_89 {dimension_numbers = #tpu.dot_dimension_numbers<[1], [0], [0], [1], [0, 0, 1, 1], [], []>} : vector<2x64xf32>, vector<64x128xf32>, vector<2x128xf32> -> vector<2x128xf32>
    %399 = vector.broadcast %2 : vector<1x128xf32> to vector<2x128xf32>
    %400 = arith.addf %398, %399 : vector<2x128xf32>
    %401 = arith.negf %400 : vector<2x128xf32>
    %402 = math.exp %401 : vector<2x128xf32>
    %cst_90 = arith.constant 1.000000e+00 : f32
    %403 = vector.broadcast %cst_90 : f32 to vector<2x128xf32>
    %404 = arith.addf %403, %402 : vector<2x128xf32>
    %405 = arith.divf %403, %404 : vector<2x128xf32>
    %406 = math.tanh %400 : vector<2x128xf32>
    %407 = vector.extract_strided_slice %405 {offsets = [0, 0], sizes = [2, 32], strides = [1, 1]} : vector<2x128xf32> to vector<2x32xf32>
    %408 = vector.extract_strided_slice %405 {offsets = [0, 32], sizes = [2, 32], strides = [1, 1]} : vector<2x128xf32> to vector<2x32xf32>
    %409 = vector.extract_strided_slice %405 {offsets = [0, 96], sizes = [2, 32], strides = [1, 1]} : vector<2x128xf32> to vector<2x32xf32>
    %410 = vector.extract_strided_slice %406 {offsets = [0, 64], sizes = [2, 32], strides = [1, 1]} : vector<2x128xf32> to vector<2x32xf32>
    %411 = arith.mulf %408, %341 : vector<2x32xf32>
    %412 = arith.mulf %407, %410 : vector<2x32xf32>
    %413 = arith.addf %411, %412 : vector<2x32xf32>
    %414 = math.tanh %413 : vector<2x32xf32>
    %415 = arith.mulf %409, %414 : vector<2x32xf32>
    %416 = arith.mulf %372, %415 : vector<2x32xf32>
    %417 = arith.mulf %374, %346 : vector<2x32xf32>
    %418 = arith.addf %416, %417 : vector<2x32xf32>
    %419 = vector.broadcast %3 : vector<1x32xf32> to vector<2x32xf32>
    %420 = arith.mulf %413, %419 : vector<2x32xf32>
    %cst_91 = arith.constant dense<0.000000e+00> : vector<2xf32>
    %421 = vector.multi_reduction <add>, %420, %cst_91 [1] : vector<2x32xf32> to vector<2xf32>
    %422 = vector.shape_cast %421 : vector<2xf32> to vector<2x1xf32>
    %423 = vector.broadcast %4 : vector<1x1xf32> to vector<2x1xf32>
    %424 = arith.addf %422, %423 : vector<2x1xf32>
    %425 = arith.negf %424 : vector<2x1xf32>
    %426 = math.exp %425 : vector<2x1xf32>
    %cst_92 = arith.constant 1.000000e+00 : f32
    %427 = vector.broadcast %cst_92 : f32 to vector<2x1xf32>
    %428 = arith.addf %427, %426 : vector<2x1xf32>
    %429 = arith.divf %427, %428 : vector<2x1xf32>
    %430 = arith.mulf %370, %429 : vector<2x1xf32>
    %cst_93 = arith.constant 1.000000e+00 : f32
    %431 = vector.broadcast %cst_93 : f32 to vector<2x1xf32>
    %432 = arith.subf %431, %370 : vector<2x1xf32>
    %cst_94 = arith.constant 1.000000e+00 : f32
    %433 = vector.broadcast %cst_94 : f32 to vector<2x1xf32>
    %434 = arith.subf %433, %366 : vector<2x1xf32>
    %435 = arith.minimumf %429, %434 : vector<2x1xf32>
    %436 = arith.addf %366, %435 : vector<2x1xf32>
    %437 = arith.mulf %432, %436 : vector<2x1xf32>
    %438 = arith.addf %430, %437 : vector<2x1xf32>
    %c5_95 = arith.constant 5 : index
    %c0_96 = arith.constant 0 : index
    %c0_97 = arith.constant 0 : index
    %439 = vector.load %arg6[%c5_95, %c0_96, %c0_97] : memref<8x2x32xf32, #tpu.memory_space<vmem>>, vector<1x2x32xf32>
    %440 = vector.shape_cast %439 : vector<1x2x32xf32> to vector<2x32xf32>
    %441 = vector.shape_cast %418 : vector<2x32xf32> to vector<1x2x32xf32>
    tpu.vector_store %arg6[%c5_95, %c0_96, %c0_97], %441 {strides = array<i32>} : memref<8x2x32xf32, #tpu.memory_space<vmem>>, vector<1x2x32xf32>,
    %442 = math.roundeven %438 : vector<2x1xf32>
    %443 = vector.shape_cast %442 : vector<2x1xf32> to vector<2x1xf32>
    %444 = vector.broadcast %443 : vector<2x1xf32> to vector<2x32xf32>
    %cst_98 = arith.constant 1.000000e+00 : f32
    %445 = vector.broadcast %cst_98 : f32 to vector<2x32xf32>
    %446 = arith.subf %445, %444 : vector<2x32xf32>
    %c6 = arith.constant 6 : index
    %c0_99 = arith.constant 0 : index
    %c0_100 = arith.constant 0 : index
    %447 = vector.load %arg0[%c6, %c0_99, %c0_100] : memref<8x2x128xf32, #tpu.memory_space<vmem>>, vector<1x2x128xf32>
    %448 = vector.shape_cast %447 : vector<1x2x128xf32> to vector<2x128xf32>
    %cst_101 = arith.constant dense<0.000000e+00> : vector<2x128xf32>
    %449 = tpu.matmul %396, %0, %cst_101 {dimension_numbers = #tpu.dot_dimension_numbers<[1], [0], [0], [1], [0, 0, 1, 1], [], []>} : vector<2x32xf32>, vector<32x128xf32>, vector<2x128xf32> -> vector<2x128xf32>
    %450 = arith.addf %448, %449 : vector<2x128xf32>
    %451 = arith.negf %450 : vector<2x128xf32>
    %452 = math.exp %451 : vector<2x128xf32>
    %cst_102 = arith.constant 1.000000e+00 : f32
    %453 = vector.broadcast %cst_102 : f32 to vector<2x128xf32>
    %454 = arith.addf %453, %452 : vector<2x128xf32>
    %455 = arith.divf %453, %454 : vector<2x128xf32>
    %456 = math.tanh %450 : vector<2x128xf32>
    %457 = vector.extract_strided_slice %455 {offsets = [0, 0], sizes = [2, 32], strides = [1, 1]} : vector<2x128xf32> to vector<2x32xf32>
    %458 = vector.extract_strided_slice %455 {offsets = [0, 32], sizes = [2, 32], strides = [1, 1]} : vector<2x128xf32> to vector<2x32xf32>
    %459 = vector.extract_strided_slice %455 {offsets = [0, 96], sizes = [2, 32], strides = [1, 1]} : vector<2x128xf32> to vector<2x32xf32>
    %460 = vector.extract_strided_slice %456 {offsets = [0, 64], sizes = [2, 32], strides = [1, 1]} : vector<2x128xf32> to vector<2x32xf32>
    %461 = arith.mulf %458, %391 : vector<2x32xf32>
    %462 = arith.mulf %457, %460 : vector<2x32xf32>
    %463 = arith.addf %461, %462 : vector<2x32xf32>
    %464 = math.tanh %463 : vector<2x32xf32>
    %465 = arith.mulf %459, %464 : vector<2x32xf32>
    %466 = arith.mulf %444, %465 : vector<2x32xf32>
    %467 = arith.mulf %446, %396 : vector<2x32xf32>
    %468 = arith.addf %466, %467 : vector<2x32xf32>
    %469 = tpu.concatenate %468, %418 in 1 : vector<2x32xf32>, vector<2x32xf32> -> vector<2x64xf32>
    %cst_103 = arith.constant dense<0.000000e+00> : vector<2x128xf32>
    %470 = tpu.matmul %469, %1, %cst_103 {dimension_numbers = #tpu.dot_dimension_numbers<[1], [0], [0], [1], [0, 0, 1, 1], [], []>} : vector<2x64xf32>, vector<64x128xf32>, vector<2x128xf32> -> vector<2x128xf32>
    %471 = vector.broadcast %2 : vector<1x128xf32> to vector<2x128xf32>
    %472 = arith.addf %470, %471 : vector<2x128xf32>
    %473 = arith.negf %472 : vector<2x128xf32>
    %474 = math.exp %473 : vector<2x128xf32>
    %cst_104 = arith.constant 1.000000e+00 : f32
    %475 = vector.broadcast %cst_104 : f32 to vector<2x128xf32>
    %476 = arith.addf %475, %474 : vector<2x128xf32>
    %477 = arith.divf %475, %476 : vector<2x128xf32>
    %478 = math.tanh %472 : vector<2x128xf32>
    %479 = vector.extract_strided_slice %477 {offsets = [0, 0], sizes = [2, 32], strides = [1, 1]} : vector<2x128xf32> to vector<2x32xf32>
    %480 = vector.extract_strided_slice %477 {offsets = [0, 32], sizes = [2, 32], strides = [1, 1]} : vector<2x128xf32> to vector<2x32xf32>
    %481 = vector.extract_strided_slice %477 {offsets = [0, 96], sizes = [2, 32], strides = [1, 1]} : vector<2x128xf32> to vector<2x32xf32>
    %482 = vector.extract_strided_slice %478 {offsets = [0, 64], sizes = [2, 32], strides = [1, 1]} : vector<2x128xf32> to vector<2x32xf32>
    %483 = arith.mulf %480, %413 : vector<2x32xf32>
    %484 = arith.mulf %479, %482 : vector<2x32xf32>
    %485 = arith.addf %483, %484 : vector<2x32xf32>
    %486 = math.tanh %485 : vector<2x32xf32>
    %487 = arith.mulf %481, %486 : vector<2x32xf32>
    %488 = arith.mulf %444, %487 : vector<2x32xf32>
    %489 = arith.mulf %446, %418 : vector<2x32xf32>
    %490 = arith.addf %488, %489 : vector<2x32xf32>
    %491 = vector.broadcast %3 : vector<1x32xf32> to vector<2x32xf32>
    %492 = arith.mulf %485, %491 : vector<2x32xf32>
    %cst_105 = arith.constant dense<0.000000e+00> : vector<2xf32>
    %493 = vector.multi_reduction <add>, %492, %cst_105 [1] : vector<2x32xf32> to vector<2xf32>
    %494 = vector.shape_cast %493 : vector<2xf32> to vector<2x1xf32>
    %495 = vector.broadcast %4 : vector<1x1xf32> to vector<2x1xf32>
    %496 = arith.addf %494, %495 : vector<2x1xf32>
    %497 = arith.negf %496 : vector<2x1xf32>
    %498 = math.exp %497 : vector<2x1xf32>
    %cst_106 = arith.constant 1.000000e+00 : f32
    %499 = vector.broadcast %cst_106 : f32 to vector<2x1xf32>
    %500 = arith.addf %499, %498 : vector<2x1xf32>
    %501 = arith.divf %499, %500 : vector<2x1xf32>
    %502 = arith.mulf %442, %501 : vector<2x1xf32>
    %cst_107 = arith.constant 1.000000e+00 : f32
    %503 = vector.broadcast %cst_107 : f32 to vector<2x1xf32>
    %504 = arith.subf %503, %442 : vector<2x1xf32>
    %cst_108 = arith.constant 1.000000e+00 : f32
    %505 = vector.broadcast %cst_108 : f32 to vector<2x1xf32>
    %506 = arith.subf %505, %438 : vector<2x1xf32>
    %507 = arith.minimumf %501, %506 : vector<2x1xf32>
    %508 = arith.addf %438, %507 : vector<2x1xf32>
    %509 = arith.mulf %504, %508 : vector<2x1xf32>
    %510 = arith.addf %502, %509 : vector<2x1xf32>
    %c6_109 = arith.constant 6 : index
    %c0_110 = arith.constant 0 : index
    %c0_111 = arith.constant 0 : index
    %511 = vector.load %arg6[%c6_109, %c0_110, %c0_111] : memref<8x2x32xf32, #tpu.memory_space<vmem>>, vector<1x2x32xf32>
    %512 = vector.shape_cast %511 : vector<1x2x32xf32> to vector<2x32xf32>
    %513 = vector.shape_cast %490 : vector<2x32xf32> to vector<1x2x32xf32>
    tpu.vector_store %arg6[%c6_109, %c0_110, %c0_111], %513 {strides = array<i32>} : memref<8x2x32xf32, #tpu.memory_space<vmem>>, vector<1x2x32xf32>,
    %514 = math.roundeven %510 : vector<2x1xf32>
    %515 = vector.shape_cast %514 : vector<2x1xf32> to vector<2x1xf32>
    %516 = vector.broadcast %515 : vector<2x1xf32> to vector<2x32xf32>
    %cst_112 = arith.constant 1.000000e+00 : f32
    %517 = vector.broadcast %cst_112 : f32 to vector<2x32xf32>
    %518 = arith.subf %517, %516 : vector<2x32xf32>
    %c7 = arith.constant 7 : index
    %c0_113 = arith.constant 0 : index
    %c0_114 = arith.constant 0 : index
    %519 = vector.load %arg0[%c7, %c0_113, %c0_114] : memref<8x2x128xf32, #tpu.memory_space<vmem>>, vector<1x2x128xf32>
    %520 = vector.shape_cast %519 : vector<1x2x128xf32> to vector<2x128xf32>
    %cst_115 = arith.constant dense<0.000000e+00> : vector<2x128xf32>
    %521 = tpu.matmul %468, %0, %cst_115 {dimension_numbers = #tpu.dot_dimension_numbers<[1], [0], [0], [1], [0, 0, 1, 1], [], []>} : vector<2x32xf32>, vector<32x128xf32>, vector<2x128xf32> -> vector<2x128xf32>
    %522 = arith.addf %520, %521 : vector<2x128xf32>
    %523 = arith.negf %522 : vector<2x128xf32>
    %524 = math.exp %523 : vector<2x128xf32>
    %cst_116 = arith.constant 1.000000e+00 : f32
    %525 = vector.broadcast %cst_116 : f32 to vector<2x128xf32>
    %526 = arith.addf %525, %524 : vector<2x128xf32>
    %527 = arith.divf %525, %526 : vector<2x128xf32>
    %528 = math.tanh %522 : vector<2x128xf32>
    %529 = vector.extract_strided_slice %527 {offsets = [0, 0], sizes = [2, 32], strides = [1, 1]} : vector<2x128xf32> to vector<2x32xf32>
    %530 = vector.extract_strided_slice %527 {offsets = [0, 32], sizes = [2, 32], strides = [1, 1]} : vector<2x128xf32> to vector<2x32xf32>
    %531 = vector.extract_strided_slice %527 {offsets = [0, 96], sizes = [2, 32], strides = [1, 1]} : vector<2x128xf32> to vector<2x32xf32>
    %532 = vector.extract_strided_slice %528 {offsets = [0, 64], sizes = [2, 32], strides = [1, 1]} : vector<2x128xf32> to vector<2x32xf32>
    %533 = arith.mulf %530, %463 : vector<2x32xf32>
    %534 = arith.mulf %529, %532 : vector<2x32xf32>
    %535 = arith.addf %533, %534 : vector<2x32xf32>
    %536 = math.tanh %535 : vector<2x32xf32>
    %537 = arith.mulf %531, %536 : vector<2x32xf32>
    %538 = arith.mulf %516, %537 : vector<2x32xf32>
    %539 = arith.mulf %518, %468 : vector<2x32xf32>
    %540 = arith.addf %538, %539 : vector<2x32xf32>
    %541 = tpu.concatenate %540, %490 in 1 : vector<2x32xf32>, vector<2x32xf32> -> vector<2x64xf32>
    %cst_117 = arith.constant dense<0.000000e+00> : vector<2x128xf32>
    %542 = tpu.matmul %541, %1, %cst_117 {dimension_numbers = #tpu.dot_dimension_numbers<[1], [0], [0], [1], [0, 0, 1, 1], [], []>} : vector<2x64xf32>, vector<64x128xf32>, vector<2x128xf32> -> vector<2x128xf32>
    %543 = vector.broadcast %2 : vector<1x128xf32> to vector<2x128xf32>
    %544 = arith.addf %542, %543 : vector<2x128xf32>
    %545 = arith.negf %544 : vector<2x128xf32>
    %546 = math.exp %545 : vector<2x128xf32>
    %cst_118 = arith.constant 1.000000e+00 : f32
    %547 = vector.broadcast %cst_118 : f32 to vector<2x128xf32>
    %548 = arith.addf %547, %546 : vector<2x128xf32>
    %549 = arith.divf %547, %548 : vector<2x128xf32>
    %550 = math.tanh %544 : vector<2x128xf32>
    %551 = vector.extract_strided_slice %549 {offsets = [0, 0], sizes = [2, 32], strides = [1, 1]} : vector<2x128xf32> to vector<2x32xf32>
    %552 = vector.extract_strided_slice %549 {offsets = [0, 32], sizes = [2, 32], strides = [1, 1]} : vector<2x128xf32> to vector<2x32xf32>
    %553 = vector.extract_strided_slice %549 {offsets = [0, 96], sizes = [2, 32], strides = [1, 1]} : vector<2x128xf32> to vector<2x32xf32>
    %554 = vector.extract_strided_slice %550 {offsets = [0, 64], sizes = [2, 32], strides = [1, 1]} : vector<2x128xf32> to vector<2x32xf32>
    %555 = arith.mulf %552, %485 : vector<2x32xf32>
    %556 = arith.mulf %551, %554 : vector<2x32xf32>
    %557 = arith.addf %555, %556 : vector<2x32xf32>
    %558 = math.tanh %557 : vector<2x32xf32>
    %559 = arith.mulf %553, %558 : vector<2x32xf32>
    %560 = arith.mulf %516, %559 : vector<2x32xf32>
    %561 = arith.mulf %518, %490 : vector<2x32xf32>
    %562 = arith.addf %560, %561 : vector<2x32xf32>
    %563 = vector.broadcast %3 : vector<1x32xf32> to vector<2x32xf32>
    %564 = arith.mulf %557, %563 : vector<2x32xf32>
    %cst_119 = arith.constant dense<0.000000e+00> : vector<2xf32>
    %565 = vector.multi_reduction <add>, %564, %cst_119 [1] : vector<2x32xf32> to vector<2xf32>
    %566 = vector.shape_cast %565 : vector<2xf32> to vector<2x1xf32>
    %567 = vector.broadcast %4 : vector<1x1xf32> to vector<2x1xf32>
    %568 = arith.addf %566, %567 : vector<2x1xf32>
    %569 = arith.negf %568 : vector<2x1xf32>
    %570 = math.exp %569 : vector<2x1xf32>
    %cst_120 = arith.constant 1.000000e+00 : f32
    %571 = vector.broadcast %cst_120 : f32 to vector<2x1xf32>
    %572 = arith.addf %571, %570 : vector<2x1xf32>
    %573 = arith.divf %571, %572 : vector<2x1xf32>
    %574 = arith.mulf %514, %573 : vector<2x1xf32>
    %cst_121 = arith.constant 1.000000e+00 : f32
    %575 = vector.broadcast %cst_121 : f32 to vector<2x1xf32>
    %576 = arith.subf %575, %514 : vector<2x1xf32>
    %cst_122 = arith.constant 1.000000e+00 : f32
    %577 = vector.broadcast %cst_122 : f32 to vector<2x1xf32>
    %578 = arith.subf %577, %510 : vector<2x1xf32>
    %579 = arith.minimumf %573, %578 : vector<2x1xf32>
    %580 = arith.addf %510, %579 : vector<2x1xf32>
    %581 = arith.mulf %576, %580 : vector<2x1xf32>
    %582 = arith.addf %574, %581 : vector<2x1xf32>
    %c7_123 = arith.constant 7 : index
    %c0_124 = arith.constant 0 : index
    %c0_125 = arith.constant 0 : index
    %583 = vector.load %arg6[%c7_123, %c0_124, %c0_125] : memref<8x2x32xf32, #tpu.memory_space<vmem>>, vector<1x2x32xf32>
    %584 = vector.shape_cast %583 : vector<1x2x32xf32> to vector<2x32xf32>
    %585 = vector.shape_cast %562 : vector<2x32xf32> to vector<1x2x32xf32>
    tpu.vector_store %arg6[%c7_123, %c0_124, %c0_125], %585 {strides = array<i32>} : memref<8x2x32xf32, #tpu.memory_space<vmem>>, vector<1x2x32xf32>,
    %c0_126 = arith.constant 0 : index
    %c0_127 = arith.constant 0 : index
    %c0_128 = arith.constant 0 : index
    %586 = vector.load %arg7[%c0_126, %c0_127, %c0_128] : memref<2x2x32xf32, #tpu.memory_space<vmem>>, vector<1x2x32xf32>
    %587 = vector.shape_cast %586 : vector<1x2x32xf32> to vector<2x32xf32>
    %588 = vector.shape_cast %540 : vector<2x32xf32> to vector<1x2x32xf32>
    tpu.vector_store %arg7[%c0_126, %c0_127, %c0_128], %588 {strides = array<i32>} : memref<2x2x32xf32, #tpu.memory_space<vmem>>, vector<1x2x32xf32>,
    %c0_129 = arith.constant 0 : index
    %c0_130 = arith.constant 0 : index
    %c0_131 = arith.constant 0 : index
    %589 = vector.load %arg8[%c0_129, %c0_130, %c0_131] : memref<2x2x32xf32, #tpu.memory_space<vmem>>, vector<1x2x32xf32>
    %590 = vector.shape_cast %589 : vector<1x2x32xf32> to vector<2x32xf32>
    %591 = vector.shape_cast %535 : vector<2x32xf32> to vector<1x2x32xf32>
    tpu.vector_store %arg8[%c0_129, %c0_130, %c0_131], %591 {strides = array<i32>} : memref<2x2x32xf32, #tpu.memory_space<vmem>>, vector<1x2x32xf32>,
    %c1_132 = arith.constant 1 : index
    %c0_133 = arith.constant 0 : index
    %c0_134 = arith.constant 0 : index
    %592 = vector.load %arg7[%c1_132, %c0_133, %c0_134] : memref<2x2x32xf32, #tpu.memory_space<vmem>>, vector<1x2x32xf32>
    %593 = vector.shape_cast %592 : vector<1x2x32xf32> to vector<2x32xf32>
    %594 = vector.shape_cast %562 : vector<2x32xf32> to vector<1x2x32xf32>
    tpu.vector_store %arg7[%c1_132, %c0_133, %c0_134], %594 {strides = array<i32>} : memref<2x2x32xf32, #tpu.memory_space<vmem>>, vector<1x2x32xf32>,
    %c1_135 = arith.constant 1 : index
    %c0_136 = arith.constant 0 : index
    %c0_137 = arith.constant 0 : index
    %595 = vector.load %arg8[%c1_135, %c0_136, %c0_137] : memref<2x2x32xf32, #tpu.memory_space<vmem>>, vector<1x2x32xf32>
    %596 = vector.shape_cast %595 : vector<1x2x32xf32> to vector<2x32xf32>
    %597 = vector.shape_cast %557 : vector<2x32xf32> to vector<1x2x32xf32>
    tpu.vector_store %arg8[%c1_135, %c0_136, %c0_137], %597 {strides = array<i32>} : memref<2x2x32xf32, #tpu.memory_space<vmem>>, vector<1x2x32xf32>,
    %c0_138 = arith.constant 0 : index
    %c0_139 = arith.constant 0 : index
    %598 = vector.load %arg9[%c0_138, %c0_139] : memref<2x1xf32, #tpu.memory_space<vmem>>, vector<2x1xf32>
    tpu.vector_store %arg9[%c0_138, %c0_139], %582 {strides = array<i32>} : memref<2x1xf32, #tpu.memory_space<vmem>>, vector<2x1xf32>,
    return
  }
}

</mosaic_0001>

<llo_original>
// kernel: tpu_custom_call.1
$region0: #{tpu_custom_call.1}
  #allocation0 [shape = 'u32[]', space=smem, size = 0x4, offset = 0x4, fixed_abs, tag = 'smem constant byte address 0x4 - core index']
  #allocation1 [shape = 'u32[72,128]{1,0:T(1,128)}', space=vmem, size = 0x9000, scoped, tag = 'internal scratch']
  #allocation2 [shape = 'f32[1,1]{1,0:T(1,128)S(1)}', space=vmem, size = 0x200, scoped, tag = 'scoped memory for tpu_custom_call.1']
  %s0 = inlined_call_operand.hbm [shape: f32[8,2,128], index: 0, kind: input, shape index: {}]
  %s1 = inlined_call_operand.hbm [shape: f32[32,128], index: 1, kind: input, shape index: {}]
  %s2 = inlined_call_operand.hbm [shape: f32[64,128], index: 2, kind: input, shape index: {}]
  %s3 = inlined_call_operand.vmem [shape: f32[1,128], index: 3, kind: input, shape index: {}]
  %s4 = inlined_call_operand.vmem [shape: f32[1,32], index: 4, kind: input, shape index: {}]
  %s5 = inlined_call_operand.<no memory space> [shape: f32[1,1], index: 5, kind: input, shape index: {}]
  %s6 = inlined_call_operand.hbm [shape: f32[8,2,32], index: 6, kind: output, shape index: {0}]
  %s7 = inlined_call_operand.hbm [shape: f32[2,2,32], index: 7, kind: output, shape index: {1}]
  %s8 = inlined_call_operand.hbm [shape: f32[2,2,32], index: 8, kind: output, shape index: {2}]
  %s9 = inlined_call_operand.vmem [shape: f32[2,1], index: 9, kind: output, shape index: {3}]
  %10 = xla_tuple %s6, %s7, %s8, %s9
  %s11 = sld [smem:[#allocation0]]
  $region70: #{tpu_custom_call.1} parent=0
    _
  %s13 = ssub.s32 1, %s11
  %s14 = scalar_select 0, %s13, %s11
  %v15 = vstv %s5
  %16 = vst [vmem:[#allocation2] sm:$0x1] %v15
  $region1: #{tpu_custom_call.1} parent=0
    #allocation3 [shape = 'u8[8192]{0}', space=vmem, size = 0x2000, scoped, tag = 'input window, operand 0, single buffered']
    #allocation4 [shape = 's32[1]{0}', space=sflag, size = 0x4, scoped, tag = 'scoped memory for tpu_custom_call.1']
    #allocation5 [shape = 's32[1]{0}', space=sflag, size = 0x4, scoped, tag = 'scoped memory for tpu_custom_call.1']
    #allocation6 [shape = 'u8[16384]{0}', space=vmem, size = 0x4000, scoped, tag = 'input window, operand 1, single buffered']
    #allocation7 [shape = 's32[1]{0}', space=sflag, size = 0x4, scoped, tag = 'scoped memory for tpu_custom_call.1']
    #allocation8 [shape = 'u8[32768]{0}', space=vmem, size = 0x8000, scoped, tag = 'input window, operand 2, single buffered']
    #allocation9 [shape = 'u8[8192]{0}', space=vmem, size = 0x2000, scoped, tag = 'output window, operand 0, single buffered']
    #allocation10 [shape = 'u8[2048]{0}', space=vmem, size = 0x800, scoped, tag = 'output window, operand 1, single buffered']
    #allocation11 [shape = 's32[1]{0}', space=sflag, size = 0x4, scoped, tag = 'scoped memory for tpu_custom_call.1']
    #allocation12 [shape = 'u8[2048]{0}', space=vmem, size = 0x800, scoped, tag = 'output window, operand 2, single buffered']
    %17 = vsyncpa [#allocation4], 0
    %18 = vsyncpa [#allocation7], 0
    %19 = vsyncpa [#allocation5], 0
    %20 = vsyncpa [#allocation11], 0
    // Predicated region
    $region2: #{tpu_custom_call.1} parent=1 // pred_check
      _
    $region3: #{tpu_custom_call.1} parent=1 // pred_check_branch
      %22 = sbr.rel (0) target = $region5
    $region4: #{tpu_custom_call.1} parent=1 // pred_region
      %24 = vsyncadd [#allocation4], 0
      %s25 = sshll.u32 %s0, 4
      %s26 = int_to_ptr.hbm [resolvable:$true] %s25
      %s27 = sshll.u32 [#allocation3], 4
      %s28 = int_to_ptr.vmem [resolvable:$true] %s27
      %33 = dma.hbm_to_vmem [thread:$0]  %s26, 256, %s28, [#allocation4], 32, 32, 2
    $region5: #{tpu_custom_call.1} parent=1 // pred_fallthru
      _
    // Predicated region
    $region6: #{tpu_custom_call.1} parent=1 // pred_check
      _
    $region7: #{tpu_custom_call.1} parent=1 // pred_check_branch
      %35 = sbr.rel (0) target = $region9
    $region8: #{tpu_custom_call.1} parent=1 // pred_region
      %37 = vsyncadd [#allocation7], 0
      %s38 = sshll.u32 %s1, 4
      %s39 = int_to_ptr.hbm [resolvable:$true] %s38
      %s40 = sshll.u32 [#allocation6], 4
      %s41 = int_to_ptr.vmem [resolvable:$true] %s40
      %46 = dma.hbm_to_vmem [thread:$0]  %s39, 512, %s41, [#allocation7], 128, 128, 8
    $region9: #{tpu_custom_call.1} parent=1 // pred_fallthru
      _
    // Predicated region
    $region10: #{tpu_custom_call.1} parent=1 // pred_check
      _
    $region11: #{tpu_custom_call.1} parent=1 // pred_check_branch
      %48 = sbr.rel (0) target = $region13
    $region12: #{tpu_custom_call.1} parent=1 // pred_region
      %50 = vsyncadd [#allocation7], 0
      %s51 = sshll.u32 %s2, 4
      %s52 = int_to_ptr.hbm [resolvable:$true] %s51
      %s53 = sshll.u32 [#allocation8], 4
      %s54 = int_to_ptr.vmem [resolvable:$true] %s53
      %59 = dma.hbm_to_vmem [thread:$0]  %s52, 1024, %s54, [#allocation7], 128, 128, 8
    $region13: #{tpu_custom_call.1} parent=1 // pred_fallthru
      _
    // Predicated region
    $region14: #{tpu_custom_call.1} parent=1 // pred_check
      _
    $region15: #{tpu_custom_call.1} parent=1 // pred_check_branch
      %61 = sbr.rel (0) target = $region17
    $region16: #{tpu_custom_call.1} parent=1 // pred_region
      _
    $region17: #{tpu_custom_call.1} parent=1 // pred_fallthru
      _
    // Predicated region
    $region18: #{tpu_custom_call.1} parent=1 // pred_check
      _
    $region19: #{tpu_custom_call.1} parent=1 // pred_check_branch
      %63 = sbr.rel (0) target = $region21
    $region20: #{tpu_custom_call.1} parent=1 // pred_region
      _
    $region21: #{tpu_custom_call.1} parent=1 // pred_fallthru
      _
    // Predicated region
    $region22: #{tpu_custom_call.1} parent=1 // pred_check
      _
    $region23: #{tpu_custom_call.1} parent=1 // pred_check_branch
      %65 = sbr.rel (0) target = $region25
    $region24: #{tpu_custom_call.1} parent=1 // pred_region
      _
    $region25: #{tpu_custom_call.1} parent=1 // pred_fallthru
      _
    // Predicated region
    $region26: #{tpu_custom_call.1} parent=1 // pred_check
      _
    $region27: #{tpu_custom_call.1} parent=1 // pred_check_branch
      %67 = sbr.rel (0) target = $region29
    $region28: #{tpu_custom_call.1} parent=1 // pred_region
      %69 = dma.done [#allocation4], 256
    $region29: #{tpu_custom_call.1} parent=1 // pred_fallthru
      _
    // Predicated region
    $region30: #{tpu_custom_call.1} parent=1 // pred_check
      _
    $region31: #{tpu_custom_call.1} parent=1 // pred_check_branch
      %71 = sbr.rel (0) target = $region33
    $region32: #{tpu_custom_call.1} parent=1 // pred_region
      %73 = dma.done [#allocation7], 512
    $region33: #{tpu_custom_call.1} parent=1 // pred_fallthru
      _
    // Predicated region
    $region34: #{tpu_custom_call.1} parent=1 // pred_check
      _
    $region35: #{tpu_custom_call.1} parent=1 // pred_check_branch
      %75 = sbr.rel (0) target = $region37
    $region36: #{tpu_custom_call.1} parent=1 // pred_region
      %77 = dma.done [#allocation7], 1024
    $region37: #{tpu_custom_call.1} parent=1 // pred_fallthru
      _
    %v78 = vld [vmem:[#allocation6] sm:$0xff]
    %v79 = vld [vmem:[#allocation6 + $0x8] sm:$0xff]
    %v80 = vld [vmem:[#allocation6 + $0x10] sm:$0xff]
    %v81 = vld [vmem:[#allocation6 + $0x18] sm:$0xff]
    %v82 = vld [vmem:[#allocation8] sm:$0xff]
    %v83 = vld [vmem:[#allocation8 + $0x8] sm:$0xff]
    %v84 = vld [vmem:[#allocation8 + $0x10] sm:$0xff]
    %v85 = vld [vmem:[#allocation8 + $0x18] sm:$0xff]
    %v86 = vld [vmem:[#allocation8 + $0x20] sm:$0xff]
    %v87 = vld [vmem:[#allocation8 + $0x28] sm:$0xff]
    %v88 = vld [vmem:[#allocation8 + $0x30] sm:$0xff]
    %v89 = vld [vmem:[#allocation8 + $0x38] sm:$0xff]
    %v90 = vld [vmem:[%s3] sm:$0x1]
    %v91 = vld [vmem:[%s4] sm:$0x1]
    %v92 = vld [vmem:[#allocation2] sm:$0x1]
    %v93 = vld [vmem:[#allocation3] sm:$0x3]
    %vm94 = vcmask 261120
    %v96 = vsel %vm94, 0.0, 0
    %98 = vmatpush.msra.mxu0 0.0
    %99 = vmatpush.msra.mxu0 0.0
    %100 = vmatpush.msra.mxu0 0.0
    %101 = vmatpush.msra.mxu0 0.0
    %102 = vmatpush.msra.mxu0 0.0
    %103 = vmatpush.msra.mxu0 0.0
    %104 = vmatpush.msra.mxu0 0.0
    %105 = vmatpush.msra.mxu0 0.0
    %106 = vmatpush.msra.mxu0 0.0
    %107 = vmatpush.msra.mxu0 0.0
    %108 = vmatpush.msra.mxu0 0.0
    %109 = vmatpush.msra.mxu0 0.0
    %110 = vmatpush.msra.mxu0 %v81
    %111 = vmatpush.msra.mxu0 %v80
    %112 = vmatpush.msra.mxu0 %v79
    %113 = vmatpush.msra.mxu0 %v78
    %114 = vmatmul.f32.gmra.mxu0 %v96
    %v115 = vpop.f32.mrf.mxu0
    %v116 = vadd.f32 0.0, %v115
    %117 = vdwg.mxu0
    %v118 = vadd.f32 %v93, %v116
    %v119 = vxor.u32 %v118, 2147483648
    %v120 = vmul.f32 %v119, 1.442695
    %v121 = vpow.pop %v120
    %v122 = vadd.f32 %v121, 1.0
    %v123 = vrcp.pop %v122
    %v124 = vmul.f32 %v122, %v123
    %v125 = vsub.f32 1.0, %v124
    %v126 = vmul.f32 %v123, %v125
    %v127 = vadd.f32 %v123, %v126
    %vm128 = vweird.f32 %v122
    %vm129 = vweird.f32 %v123
    %vm130 = vmor %vm128, %vm129
    %v131 = vsel %vm130, %v123, %v127
    %v132 = vand.u32 2147483647, %v122
    %vm133 = vcmp.eq.f32.partialorder %v132, 8.507059e+37
    %v134 = vand.u32 %v122, 2147483648
    %v135 = vor.u32 1.1754944e-38, %v134
    %v136 = vsel %vm133, %v135, %v131
    %v137 = vmul.f32 1.0, %v136
    %v138 = vtanh.pop %v118
    %v139 = vmul.f32 %v137, 0.0
    %141 = vrot.lane.b32.xlu0 %v138, 64
    %v142 = vpop.permute.xlu0 %141
    %v144 = vmul.f32 %v137, %v142
    %146 = vrot.lane.b32.xlu0 %v144, 32
    %v147 = vpop.permute.xlu0 %146
    %v149 = vadd.f32 %v139, %v147
    %v150 = vtanh.pop %v149
    %152 = vrot.lane.b32.xlu0 %v150, 64
    %v153 = vpop.permute.xlu0 %152
    %v155 = vmul.f32 %v137, %v153
    %v156 = vadd.f32 %v155, 0.0
    %158 = vrot.lane.b32.xlu0 %v156, 32
    %v159 = vpop.permute.xlu0 %158
    %v161 = vsel %vm94, %v159, 0.0
    %v163 = vperm.slane %v90, 0
    %vm165 = vcmask 523264
    %v167 = vsel %vm165, %v161, 0
    %169 = vmatpush.msra.mxu0 0.0
    %170 = vmatpush.msra.mxu0 0.0
    %171 = vmatpush.msra.mxu0 0.0
    %172 = vmatpush.msra.mxu0 0.0
    %173 = vmatpush.msra.mxu0 0.0
    %174 = vmatpush.msra.mxu0 0.0
    %175 = vmatpush.msra.mxu0 0.0
    %176 = vmatpush.msra.mxu0 0.0
    %177 = vmatpush.msra.mxu0 %v89
    %178 = vmatpush.msra.mxu0 %v88
    %179 = vmatpush.msra.mxu0 %v87
    %180 = vmatpush.msra.mxu0 %v86
    %181 = vmatpush.msra.mxu0 %v85
    %182 = vmatpush.msra.mxu0 %v84
    %183 = vmatpush.msra.mxu0 %v83
    %184 = vmatpush.msra.mxu0 %v82
    %185 = vmatmul.f32.gmra.mxu0 %v167
    %v186 = vpop.f32.mrf.mxu0
    %v187 = vadd.f32 %v163, %v186
    %188 = vdwg.mxu0
    %v189 = vxor.u32 %v187, 2147483648
    %v190 = vmul.f32 %v189, 1.442695
    %v191 = vpow.pop %v190
    %v192 = vadd.f32 %v191, 1.0
    %v193 = vrcp.pop %v192
    %v194 = vmul.f32 %v192, %v193
    %v195 = vsub.f32 1.0, %v194
    %v196 = vmul.f32 %v193, %v195
    %v197 = vadd.f32 %v193, %v196
    %vm198 = vweird.f32 %v192
    %vm199 = vweird.f32 %v193
    %vm200 = vmor %vm198, %vm199
    %v201 = vsel %vm200, %v193, %v197
    %v202 = vand.u32 2147483647, %v192
    %vm203 = vcmp.eq.f32.partialorder %v202, 8.507059e+37
    %v204 = vand.u32 %v192, 2147483648
    %v205 = vor.u32 1.1754944e-38, %v204
    %v206 = vsel %vm203, %v205, %v201
    %v207 = vmul.f32 1.0, %v206
    %v208 = vtanh.pop %v187
    %v209 = vmul.f32 %v207, 0.0
    %211 = vrot.lane.b32.xlu0 %v208, 64
    %v212 = vpop.permute.xlu0 %211
    %v214 = vmul.f32 %v207, %v212
    %216 = vrot.lane.b32.xlu0 %v214, 32
    %v217 = vpop.permute.xlu0 %216
    %v219 = vadd.f32 %v209, %v217
    %v220 = vtanh.pop %v219
    %222 = vrot.lane.b32.xlu0 %v220, 64
    %v223 = vpop.permute.xlu0 %222
    %v225 = vmul.f32 %v207, %v223
    %v226 = vadd.f32 %v225, 0.0
    %v228 = vperm.slane %v91, 0
    %229 = vrot.lane.b32.xlu0 %v228, 32
    %v230 = vpop.permute.xlu0 %229
    %v232 = vmul.f32 %v219, %v230
    %234 = vrot.lane.b32.xlu0 %v232, 96
    %v235 = vpop.permute.xlu0 %234
    %vm237 = vcmask 254976
    %v238 = vsel %vm237, %v235, 0.0
    %239 = vadd.xlane.f32.xlu0 %v238
    %v240 = vpop.xlane.xlu0 %239
    %v242 = vperm.slane %v92, 0
    %v244 = vadd.f32 %v240, %v242
    %v245 = vxor.u32 %v244, 2147483648
    %v246 = vmul.f32 %v245, 1.442695
    %v247 = vpow.pop %v246
    %v248 = vadd.f32 %v247, 1.0
    %v249 = vrcp.pop %v248
    %v250 = vmul.f32 %v248, %v249
    %v251 = vsub.f32 1.0, %v250
    %v252 = vmul.f32 %v249, %v251
    %v253 = vadd.f32 %v249, %v252
    %vm254 = vweird.f32 %v248
    %vm255 = vweird.f32 %v249
    %vm256 = vmor %vm254, %vm255
    %v257 = vsel %vm256, %v249, %v253
    %v258 = vand.u32 2147483647, %v248
    %vm259 = vcmp.eq.f32.partialorder %v258, 8.507059e+37
    %v260 = vand.u32 %v248, 2147483648
    %v261 = vor.u32 1.1754944e-38, %v260
    %v262 = vsel %vm259, %v261, %v257
    %v263 = vmul.f32 1.0, %v262
    %v264 = vmin.f32 %v263, 0.0
    %v265 = vadd.f32 %v264, 1.0
    %v266 = vmul.f32 %v265, 0.0
    %v267 = vadd.f32 %v263, %v266
    %269 = vrot.lane.b32.xlu0 %v226, 32
    %v270 = vpop.permute.xlu0 %269
    %272 = vst.msk [vmem:[#allocation9] sm:$0x3] %vm237, %v270
    %v273 = vround.ne.pseudo %v267
    %275 = vset.pattern.permute.xlu0 0
    %276 = vperm.xlu0 %275, %v273
    %v277 = vpop.permute.xlu0 %276
    %v279 = vsub.f32 1.0, %v277
    %s280 = scalar_lea.vmem [#allocation3], 2
    %v281 = vld [vmem:[%s280] sm:$0x3]
    %v282 = vsel %vm94, %v159, 0
    %284 = vmatpush.msra.mxu0 0.0
    %285 = vmatpush.msra.mxu0 0.0
    %286 = vmatpush.msra.mxu0 0.0
    %287 = vmatpush.msra.mxu0 0.0
    %288 = vmatpush.msra.mxu0 0.0
    %289 = vmatpush.msra.mxu0 0.0
    %290 = vmatpush.msra.mxu0 0.0
    %291 = vmatpush.msra.mxu0 0.0
    %292 = vmatpush.msra.mxu0 0.0
    %293 = vmatpush.msra.mxu0 0.0
    %294 = vmatpush.msra.mxu0 0.0
    %295 = vmatpush.msra.mxu0 0.0
    %296 = vmatpush.msra.mxu0 %v81
    %297 = vmatpush.msra.mxu0 %v80
    %298 = vmatpush.msra.mxu0 %v79
    %299 = vmatpush.msra.mxu0 %v78
    %300 = vmatmul.f32.gmra.mxu0 %v282
    %v301 = vpop.f32.mrf.mxu0
    %v302 = vadd.f32 0.0, %v301
    %303 = vdwg.mxu0
    %v304 = vadd.f32 %v281, %v302
    %v305 = vxor.u32 %v304, 2147483648
    %v306 = vmul.f32 %v305, 1.442695
    %v307 = vpow.pop %v306
    %v308 = vadd.f32 %v307, 1.0
    %v309 = vrcp.pop %v308
    %v310 = vmul.f32 %v308, %v309
    %v311 = vsub.f32 1.0, %v310
    %v312 = vmul.f32 %v309, %v311
    %v313 = vadd.f32 %v309, %v312
    %vm314 = vweird.f32 %v308
    %vm315 = vweird.f32 %v309
    %vm316 = vmor %vm314, %vm315
    %v317 = vsel %vm316, %v309, %v313
    %v318 = vand.u32 2147483647, %v308
    %vm319 = vcmp.eq.f32.partialorder %v318, 8.507059e+37
    %v320 = vand.u32 %v308, 2147483648
    %v321 = vor.u32 1.1754944e-38, %v320
    %v322 = vsel %vm319, %v321, %v317
    %v323 = vmul.f32 1.0, %v322
    %v324 = vtanh.pop %v304
    %v325 = vmul.f32 %v323, %v149
    %327 = vrot.lane.b32.xlu0 %v324, 64
    %v328 = vpop.permute.xlu0 %327
    %v330 = vmul.f32 %v323, %v328
    %332 = vrot.lane.b32.xlu0 %v330, 32
    %v333 = vpop.permute.xlu0 %332
    %v335 = vadd.f32 %v325, %v333
    %v336 = vtanh.pop %v335
    %338 = vrot.lane.b32.xlu0 %v336, 64
    %v339 = vpop.permute.xlu0 %338
    %v341 = vmul.f32 %v323, %v339
    %v342 = vmul.f32 %v277, %v341
    %v343 = vmul.f32 %v279, %v156
    %v344 = vadd.f32 %v342, %v343
    %346 = vrot.lane.b32.xlu0 %v344, 32
    %v347 = vpop.permute.xlu0 %346
    %349 = vrot.lane.b32.xlu0 %v226, 64
    %v350 = vpop.permute.xlu0 %349
    %v352 = vsel %vm94, %v347, %v350
    %v354 = vsel %vm165, %v352, 0
    %356 = vmatpush.msra.mxu0 0.0
    %357 = vmatpush.msra.mxu0 0.0
    %358 = vmatpush.msra.mxu0 0.0
    %359 = vmatpush.msra.mxu0 0.0
    %360 = vmatpush.msra.mxu0 0.0
    %361 = vmatpush.msra.mxu0 0.0
    %362 = vmatpush.msra.mxu0 0.0
    %363 = vmatpush.msra.mxu0 0.0
    %364 = vmatpush.msra.mxu0 %v89
    %365 = vmatpush.msra.mxu0 %v88
    %366 = vmatpush.msra.mxu0 %v87
    %367 = vmatpush.msra.mxu0 %v86
    %368 = vmatpush.msra.mxu0 %v85
    %369 = vmatpush.msra.mxu0 %v84
    %370 = vmatpush.msra.mxu0 %v83
    %371 = vmatpush.msra.mxu0 %v82
    %372 = vmatmul.f32.gmra.mxu0 %v354
    %v373 = vpop.f32.mrf.mxu0
    %v374 = vadd.f32 %v163, %v373
    %375 = vdwg.mxu0
    %v376 = vxor.u32 %v374, 2147483648
    %v377 = vmul.f32 %v376, 1.442695
    %v378 = vpow.pop %v377
    %v379 = vadd.f32 %v378, 1.0
    %v380 = vrcp.pop %v379
    %v381 = vmul.f32 %v379, %v380
    %v382 = vsub.f32 1.0, %v381
    %v383 = vmul.f32 %v380, %v382
    %v384 = vadd.f32 %v380, %v383
    %vm385 = vweird.f32 %v379
    %vm386 = vweird.f32 %v380
    %vm387 = vmor %vm385, %vm386
    %v388 = vsel %vm387, %v380, %v384
    %v389 = vand.u32 2147483647, %v379
    %vm390 = vcmp.eq.f32.partialorder %v389, 8.507059e+37
    %v391 = vand.u32 %v379, 2147483648
    %v392 = vor.u32 1.1754944e-38, %v391
    %v393 = vsel %vm390, %v392, %v388
    %v394 = vmul.f32 1.0, %v393
    %v395 = vtanh.pop %v374
    %v396 = vmul.f32 %v394, %v219
    %398 = vrot.lane.b32.xlu0 %v395, 64
    %v399 = vpop.permute.xlu0 %398
    %v401 = vmul.f32 %v394, %v399
    %403 = vrot.lane.b32.xlu0 %v401, 32
    %v404 = vpop.permute.xlu0 %403
    %v406 = vadd.f32 %v396, %v404
    %v407 = vtanh.pop %v406
    %409 = vrot.lane.b32.xlu0 %v407, 64
    %v410 = vpop.permute.xlu0 %409
    %v412 = vmul.f32 %v394, %v410
    %v413 = vmul.f32 %v277, %v412
    %v414 = vmul.f32 %v279, %v226
    %v415 = vadd.f32 %v413, %v414
    %v416 = vmul.f32 %v406, %v230
    %418 = vrot.lane.b32.xlu0 %v416, 96
    %v419 = vpop.permute.xlu0 %418
    %v421 = vsel %vm237, %v419, 0.0
    %422 = vadd.xlane.f32.xlu0 %v421
    %v423 = vpop.xlane.xlu0 %422
    %v424 = vadd.f32 %v423, %v242
    %v425 = vxor.u32 %v424, 2147483648
    %v426 = vmul.f32 %v425, 1.442695
    %v427 = vpow.pop %v426
    %v428 = vadd.f32 %v427, 1.0
    %v429 = vrcp.pop %v428
    %v430 = vmul.f32 %v428, %v429
    %v431 = vsub.f32 1.0, %v430
    %v432 = vmul.f32 %v429, %v431
    %v433 = vadd.f32 %v429, %v432
    %vm434 = vweird.f32 %v428
    %vm435 = vweird.f32 %v429
    %vm436 = vmor %vm434, %vm435
    %v437 = vsel %vm436, %v429, %v433
    %v438 = vand.u32 2147483647, %v428
    %vm439 = vcmp.eq.f32.partialorder %v438, 8.507059e+37
    %v440 = vand.u32 %v428, 2147483648
    %v441 = vor.u32 1.1754944e-38, %v440
    %v442 = vsel %vm439, %v441, %v437
    %v443 = vmul.f32 1.0, %v442
    %v444 = vmul.f32 %v273, %v443
    %v445 = vsub.f32 1.0, %v273
    %v446 = vsub.f32 1.0, %v267
    %v447 = vmin.f32 %v443, %v446
    %v448 = vadd.f32 %v267, %v447
    %v449 = vmul.f32 %v445, %v448
    %v450 = vadd.f32 %v444, %v449
    %452 = vrot.lane.b32.xlu0 %v415, 32
    %v453 = vpop.permute.xlu0 %452
    %s455 = scalar_lea.vmem [#allocation9], 2
    %456 = vst.msk [vmem:[%s455] sm:$0x3] %vm237, %v453
    %v457 = vround.ne.pseudo %v450
    %459 = vset.pattern.permute.xlu0 0
    %460 = vperm.xlu0 %459, %v457
    %v461 = vpop.permute.xlu0 %460
    %v463 = vsub.f32 1.0, %v461
    %s464 = scalar_lea.vmem [#allocation3], 4
    %v465 = vld [vmem:[%s464] sm:$0x3]
    %v466 = vsel %vm94, %v347, 0
    %468 = vmatpush.msra.mxu0 0.0
    %469 = vmatpush.msra.mxu0 0.0
    %470 = vmatpush.msra.mxu0 0.0
    %471 = vmatpush.msra.mxu0 0.0
    %472 = vmatpush.msra.mxu0 0.0
    %473 = vmatpush.msra.mxu0 0.0
    %474 = vmatpush.msra.mxu0 0.0
    %475 = vmatpush.msra.mxu0 0.0
    %476 = vmatpush.msra.mxu0 0.0
    %477 = vmatpush.msra.mxu0 0.0
    %478 = vmatpush.msra.mxu0 0.0
    %479 = vmatpush.msra.mxu0 0.0
    %480 = vmatpush.msra.mxu0 %v81
    %481 = vmatpush.msra.mxu0 %v80
    %482 = vmatpush.msra.mxu0 %v79
    %483 = vmatpush.msra.mxu0 %v78
    %484 = vmatmul.f32.gmra.mxu0 %v466
    %v485 = vpop.f32.mrf.mxu0
    %v486 = vadd.f32 0.0, %v485
    %487 = vdwg.mxu0
    %v488 = vadd.f32 %v465, %v486
    %v489 = vxor.u32 %v488, 2147483648
    %v490 = vmul.f32 %v489, 1.442695
    %v491 = vpow.pop %v490
    %v492 = vadd.f32 %v491, 1.0
    %v493 = vrcp.pop %v492
    %v494 = vmul.f32 %v492, %v493
    %v495 = vsub.f32 1.0, %v494
    %v496 = vmul.f32 %v493, %v495
    %v497 = vadd.f32 %v493, %v496
    %vm498 = vweird.f32 %v492
    %vm499 = vweird.f32 %v493
    %vm500 = vmor %vm498, %vm499
    %v501 = vsel %vm500, %v493, %v497
    %v502 = vand.u32 2147483647, %v492
    %vm503 = vcmp.eq.f32.partialorder %v502, 8.507059e+37
    %v504 = vand.u32 %v492, 2147483648
    %v505 = vor.u32 1.1754944e-38, %v504
    %v506 = vsel %vm503, %v505, %v501
    %v507 = vmul.f32 1.0, %v506
    %v508 = vtanh.pop %v488
    %v509 = vmul.f32 %v507, %v335
    %511 = vrot.lane.b32.xlu0 %v508, 64
    %v512 = vpop.permute.xlu0 %511
    %v514 = vmul.f32 %v507, %v512
    %516 = vrot.lane.b32.xlu0 %v514, 32
    %v517 = vpop.permute.xlu0 %516
    %v519 = vadd.f32 %v509, %v517
    %v520 = vtanh.pop %v519
    %522 = vrot.lane.b32.xlu0 %v520, 64
    %v523 = vpop.permute.xlu0 %522
    %v525 = vmul.f32 %v507, %v523
    %v526 = vmul.f32 %v461, %v525
    %v527 = vmul.f32 %v463, %v344
    %v528 = vadd.f32 %v526, %v527
    %530 = vrot.lane.b32.xlu0 %v528, 32
    %v531 = vpop.permute.xlu0 %530
    %533 = vrot.lane.b32.xlu0 %v415, 64
    %v534 = vpop.permute.xlu0 %533
    %v536 = vsel %vm94, %v531, %v534
    %v538 = vsel %vm165, %v536, 0
    %540 = vmatpush.msra.mxu0 0.0
    %541 = vmatpush.msra.mxu0 0.0
    %542 = vmatpush.msra.mxu0 0.0
    %543 = vmatpush.msra.mxu0 0.0
    %544 = vmatpush.msra.mxu0 0.0
    %545 = vmatpush.msra.mxu0 0.0
    %546 = vmatpush.msra.mxu0 0.0
    %547 = vmatpush.msra.mxu0 0.0
    %548 = vmatpush.msra.mxu0 %v89
    %549 = vmatpush.msra.mxu0 %v88
    %550 = vmatpush.msra.mxu0 %v87
    %551 = vmatpush.msra.mxu0 %v86
    %552 = vmatpush.msra.mxu0 %v85
    %553 = vmatpush.msra.mxu0 %v84
    %554 = vmatpush.msra.mxu0 %v83
    %555 = vmatpush.msra.mxu0 %v82
    %556 = vmatmul.f32.gmra.mxu0 %v538
    %v557 = vpop.f32.mrf.mxu0
    %v558 = vadd.f32 %v163, %v557
    %559 = vdwg.mxu0
    %v560 = vxor.u32 %v558, 2147483648
    %v561 = vmul.f32 %v560, 1.442695
    %v562 = vpow.pop %v561
    %v563 = vadd.f32 %v562, 1.0
    %v564 = vrcp.pop %v563
    %v565 = vmul.f32 %v563, %v564
    %v566 = vsub.f32 1.0, %v565
    %v567 = vmul.f32 %v564, %v566
    %v568 = vadd.f32 %v564, %v567
    %vm569 = vweird.f32 %v563
    %vm570 = vweird.f32 %v564
    %vm571 = vmor %vm569, %vm570
    %v572 = vsel %vm571, %v564, %v568
    %v573 = vand.u32 2147483647, %v563
    %vm574 = vcmp.eq.f32.partialorder %v573, 8.507059e+37
    %v575 = vand.u32 %v563, 2147483648
    %v576 = vor.u32 1.1754944e-38, %v575
    %v577 = vsel %vm574, %v576, %v572
    %v578 = vmul.f32 1.0, %v577
    %v579 = vtanh.pop %v558
    %v580 = vmul.f32 %v578, %v406
    %582 = vrot.lane.b32.xlu0 %v579, 64
    %v583 = vpop.permute.xlu0 %582
    %v585 = vmul.f32 %v578, %v583
    %587 = vrot.lane.b32.xlu0 %v585, 32
    %v588 = vpop.permute.xlu0 %587
    %v590 = vadd.f32 %v580, %v588
    %v591 = vtanh.pop %v590
    %593 = vrot.lane.b32.xlu0 %v591, 64
    %v594 = vpop.permute.xlu0 %593
    %v596 = vmul.f32 %v578, %v594
    %v597 = vmul.f32 %v461, %v596
    %v598 = vmul.f32 %v463, %v415
    %v599 = vadd.f32 %v597, %v598
    %v600 = vmul.f32 %v590, %v230
    %602 = vrot.lane.b32.xlu0 %v600, 96
    %v603 = vpop.permute.xlu0 %602
    %v605 = vsel %vm237, %v603, 0.0
    %606 = vadd.xlane.f32.xlu0 %v605
    %v607 = vpop.xlane.xlu0 %606
    %v608 = vadd.f32 %v607, %v242
    %v609 = vxor.u32 %v608, 2147483648
    %v610 = vmul.f32 %v609, 1.442695
    %v611 = vpow.pop %v610
    %v612 = vadd.f32 %v611, 1.0
    %v613 = vrcp.pop %v612
    %v614 = vmul.f32 %v612, %v613
    %v615 = vsub.f32 1.0, %v614
    %v616 = vmul.f32 %v613, %v615
    %v617 = vadd.f32 %v613, %v616
    %vm618 = vweird.f32 %v612
    %vm619 = vweird.f32 %v613
    %vm620 = vmor %vm618, %vm619
    %v621 = vsel %vm620, %v613, %v617
    %v622 = vand.u32 2147483647, %v612
    %vm623 = vcmp.eq.f32.partialorder %v622, 8.507059e+37
    %v624 = vand.u32 %v612, 2147483648
    %v625 = vor.u32 1.1754944e-38, %v624
    %v626 = vsel %vm623, %v625, %v621
    %v627 = vmul.f32 1.0, %v626
    %v628 = vmul.f32 %v457, %v627
    %v629 = vsub.f32 1.0, %v457
    %v630 = vsub.f32 1.0, %v450
    %v631 = vmin.f32 %v627, %v630
    %v632 = vadd.f32 %v450, %v631
    %v633 = vmul.f32 %v629, %v632
    %v634 = vadd.f32 %v628, %v633
    %636 = vrot.lane.b32.xlu0 %v599, 32
    %v637 = vpop.permute.xlu0 %636
    %s639 = scalar_lea.vmem [#allocation9], 4
    %640 = vst.msk [vmem:[%s639] sm:$0x3] %vm237, %v637
    %v641 = vround.ne.pseudo %v634
    %643 = vset.pattern.permute.xlu0 0
    %644 = vperm.xlu0 %643, %v641
    %v645 = vpop.permute.xlu0 %644
    %v647 = vsub.f32 1.0, %v645
    %s648 = scalar_lea.vmem [#allocation3], 6
    %v649 = vld [vmem:[%s648] sm:$0x3]
    %v650 = vsel %vm94, %v531, 0
    %652 = vmatpush.msra.mxu0 0.0
    %653 = vmatpush.msra.mxu0 0.0
    %654 = vmatpush.msra.mxu0 0.0
    %655 = vmatpush.msra.mxu0 0.0
    %656 = vmatpush.msra.mxu0 0.0
    %657 = vmatpush.msra.mxu0 0.0
    %658 = vmatpush.msra.mxu0 0.0
    %659 = vmatpush.msra.mxu0 0.0
    %660 = vmatpush.msra.mxu0 0.0
    %661 = vmatpush.msra.mxu0 0.0
    %662 = vmatpush.msra.mxu0 0.0
    %663 = vmatpush.msra.mxu0 0.0
    %664 = vmatpush.msra.mxu0 %v81
    %665 = vmatpush.msra.mxu0 %v80
    %666 = vmatpush.msra.mxu0 %v79
    %667 = vmatpush.msra.mxu0 %v78
    %668 = vmatmul.f32.gmra.mxu0 %v650
    %v669 = vpop.f32.mrf.mxu0
    %v670 = vadd.f32 0.0, %v669
    %671 = vdwg.mxu0
    %v672 = vadd.f32 %v649, %v670
    %v673 = vxor.u32 %v672, 2147483648
    %v674 = vmul.f32 %v673, 1.442695
    %v675 = vpow.pop %v674
    %v676 = vadd.f32 %v675, 1.0
    %v677 = vrcp.pop %v676
    %v678 = vmul.f32 %v676, %v677
    %v679 = vsub.f32 1.0, %v678
    %v680 = vmul.f32 %v677, %v679
    %v681 = vadd.f32 %v677, %v680
    %vm682 = vweird.f32 %v676
    %vm683 = vweird.f32 %v677
    %vm684 = vmor %vm682, %vm683
    %v685 = vsel %vm684, %v677, %v681
    %v686 = vand.u32 2147483647, %v676
    %vm687 = vcmp.eq.f32.partialorder %v686, 8.507059e+37
    %v688 = vand.u32 %v676, 2147483648
    %v689 = vor.u32 1.1754944e-38, %v688
    %v690 = vsel %vm687, %v689, %v685
    %v691 = vmul.f32 1.0, %v690
    %v692 = vtanh.pop %v672
    %v693 = vmul.f32 %v691, %v519
    %695 = vrot.lane.b32.xlu0 %v692, 64
    %v696 = vpop.permute.xlu0 %695
    %v698 = vmul.f32 %v691, %v696
    %700 = vrot.lane.b32.xlu0 %v698, 32
    %v701 = vpop.permute.xlu0 %700
    %v703 = vadd.f32 %v693, %v701
    %v704 = vtanh.pop %v703
    %706 = vrot.lane.b32.xlu0 %v704, 64
    %v707 = vpop.permute.xlu0 %706
    %v709 = vmul.f32 %v691, %v707
    %v710 = vmul.f32 %v645, %v709
    %v711 = vmul.f32 %v647, %v528
    %v712 = vadd.f32 %v710, %v711
    %714 = vrot.lane.b32.xlu0 %v712, 32
    %v715 = vpop.permute.xlu0 %714
    %717 = vrot.lane.b32.xlu0 %v599, 64
    %v718 = vpop.permute.xlu0 %717
    %v720 = vsel %vm94, %v715, %v718
    %v722 = vsel %vm165, %v720, 0
    %724 = vmatpush.msra.mxu0 0.0
    %725 = vmatpush.msra.mxu0 0.0
    %726 = vmatpush.msra.mxu0 0.0
    %727 = vmatpush.msra.mxu0 0.0
    %728 = vmatpush.msra.mxu0 0.0
    %729 = vmatpush.msra.mxu0 0.0
    %730 = vmatpush.msra.mxu0 0.0
    %731 = vmatpush.msra.mxu0 0.0
    %732 = vmatpush.msra.mxu0 %v89
    %733 = vmatpush.msra.mxu0 %v88
    %734 = vmatpush.msra.mxu0 %v87
    %735 = vmatpush.msra.mxu0 %v86
    %736 = vmatpush.msra.mxu0 %v85
    %737 = vmatpush.msra.mxu0 %v84
    %738 = vmatpush.msra.mxu0 %v83
    %739 = vmatpush.msra.mxu0 %v82
    %740 = vmatmul.f32.gmra.mxu0 %v722
    %v741 = vpop.f32.mrf.mxu0
    %v742 = vadd.f32 %v163, %v741
    %743 = vdwg.mxu0
    %v744 = vxor.u32 %v742, 2147483648
    %v745 = vmul.f32 %v744, 1.442695
    %v746 = vpow.pop %v745
    %v747 = vadd.f32 %v746, 1.0
    %v748 = vrcp.pop %v747
    %v749 = vmul.f32 %v747, %v748
    %v750 = vsub.f32 1.0, %v749
    %v751 = vmul.f32 %v748, %v750
    %v752 = vadd.f32 %v748, %v751
    %vm753 = vweird.f32 %v747
    %vm754 = vweird.f32 %v748
    %vm755 = vmor %vm753, %vm754
    %v756 = vsel %vm755, %v748, %v752
    %v757 = vand.u32 2147483647, %v747
    %vm758 = vcmp.eq.f32.partialorder %v757, 8.507059e+37
    %v759 = vand.u32 %v747, 2147483648
    %v760 = vor.u32 1.1754944e-38, %v759
    %v761 = vsel %vm758, %v760, %v756
    %v762 = vmul.f32 1.0, %v761
    %v763 = vtanh.pop %v742
    %v764 = vmul.f32 %v762, %v590
    %766 = vrot.lane.b32.xlu0 %v763, 64
    %v767 = vpop.permute.xlu0 %766
    %v769 = vmul.f32 %v762, %v767
    %771 = vrot.lane.b32.xlu0 %v769, 32
    %v772 = vpop.permute.xlu0 %771
    %v774 = vadd.f32 %v764, %v772
    %v775 = vtanh.pop %v774
    %777 = vrot.lane.b32.xlu0 %v775, 64
    %v778 = vpop.permute.xlu0 %777
    %v780 = vmul.f32 %v762, %v778
    %v781 = vmul.f32 %v645, %v780
    %v782 = vmul.f32 %v647, %v599
    %v783 = vadd.f32 %v781, %v782
    %v784 = vmul.f32 %v774, %v230
    %786 = vrot.lane.b32.xlu0 %v784, 96
    %v787 = vpop.permute.xlu0 %786
    %v789 = vsel %vm237, %v787, 0.0
    %790 = vadd.xlane.f32.xlu0 %v789
    %v791 = vpop.xlane.xlu0 %790
    %v792 = vadd.f32 %v791, %v242
    %v793 = vxor.u32 %v792, 2147483648
    %v794 = vmul.f32 %v793, 1.442695
    %v795 = vpow.pop %v794
    %v796 = vadd.f32 %v795, 1.0
    %v797 = vrcp.pop %v796
    %v798 = vmul.f32 %v796, %v797
    %v799 = vsub.f32 1.0, %v798
    %v800 = vmul.f32 %v797, %v799
    %v801 = vadd.f32 %v797, %v800
    %vm802 = vweird.f32 %v796
    %vm803 = vweird.f32 %v797
    %vm804 = vmor %vm802, %vm803
    %v805 = vsel %vm804, %v797, %v801
    %v806 = vand.u32 2147483647, %v796
    %vm807 = vcmp.eq.f32.partialorder %v806, 8.507059e+37
    %v808 = vand.u32 %v796, 2147483648
    %v809 = vor.u32 1.1754944e-38, %v808
    %v810 = vsel %vm807, %v809, %v805
    %v811 = vmul.f32 1.0, %v810
    %v812 = vmul.f32 %v641, %v811
    %v813 = vsub.f32 1.0, %v641
    %v814 = vsub.f32 1.0, %v634
    %v815 = vmin.f32 %v811, %v814
    %v816 = vadd.f32 %v634, %v815
    %v817 = vmul.f32 %v813, %v816
    %v818 = vadd.f32 %v812, %v817
    %820 = vrot.lane.b32.xlu0 %v783, 32
    %v821 = vpop.permute.xlu0 %820
    %s823 = scalar_lea.vmem [#allocation9], 6
    %824 = vst.msk [vmem:[%s823] sm:$0x3] %vm237, %v821
    %v825 = vround.ne.pseudo %v818
    %827 = vset.pattern.permute.xlu0 0
    %828 = vperm.xlu0 %827, %v825
    %v829 = vpop.permute.xlu0 %828
    %v831 = vsub.f32 1.0, %v829
    %s832 = scalar_lea.vmem [#allocation3], 8
    %v833 = vld [vmem:[%s832] sm:$0x3]
    %v834 = vsel %vm94, %v715, 0
    %836 = vmatpush.msra.mxu0 0.0
    %837 = vmatpush.msra.mxu0 0.0
    %838 = vmatpush.msra.mxu0 0.0
    %839 = vmatpush.msra.mxu0 0.0
    %840 = vmatpush.msra.mxu0 0.0
    %841 = vmatpush.msra.mxu0 0.0
    %842 = vmatpush.msra.mxu0 0.0
    %843 = vmatpush.msra.mxu0 0.0
    %844 = vmatpush.msra.mxu0 0.0
    %845 = vmatpush.msra.mxu0 0.0
    %846 = vmatpush.msra.mxu0 0.0
    %847 = vmatpush.msra.mxu0 0.0
    %848 = vmatpush.msra.mxu0 %v81
    %849 = vmatpush.msra.mxu0 %v80
    %850 = vmatpush.msra.mxu0 %v79
    %851 = vmatpush.msra.mxu0 %v78
    %852 = vmatmul.f32.gmra.mxu0 %v834
    %v853 = vpop.f32.mrf.mxu0
    %v854 = vadd.f32 0.0, %v853
    %855 = vdwg.mxu0
    %v856 = vadd.f32 %v833, %v854
    %v857 = vxor.u32 %v856, 2147483648
    %v858 = vmul.f32 %v857, 1.442695
    %v859 = vpow.pop %v858
    %v860 = vadd.f32 %v859, 1.0
    %v861 = vrcp.pop %v860
    %v862 = vmul.f32 %v860, %v861
    %v863 = vsub.f32 1.0, %v862
    %v864 = vmul.f32 %v861, %v863
    %v865 = vadd.f32 %v861, %v864
    %vm866 = vweird.f32 %v860
    %vm867 = vweird.f32 %v861
    %vm868 = vmor %vm866, %vm867
    %v869 = vsel %vm868, %v861, %v865
    %v870 = vand.u32 2147483647, %v860
    %vm871 = vcmp.eq.f32.partialorder %v870, 8.507059e+37
    %v872 = vand.u32 %v860, 2147483648
    %v873 = vor.u32 1.1754944e-38, %v872
    %v874 = vsel %vm871, %v873, %v869
    %v875 = vmul.f32 1.0, %v874
    %v876 = vtanh.pop %v856
    %v877 = vmul.f32 %v875, %v703
    %879 = vrot.lane.b32.xlu0 %v876, 64
    %v880 = vpop.permute.xlu0 %879
    %v882 = vmul.f32 %v875, %v880
    %884 = vrot.lane.b32.xlu0 %v882, 32
    %v885 = vpop.permute.xlu0 %884
    %v887 = vadd.f32 %v877, %v885
    %v888 = vtanh.pop %v887
    %890 = vrot.lane.b32.xlu0 %v888, 64
    %v891 = vpop.permute.xlu0 %890
    %v893 = vmul.f32 %v875, %v891
    %v894 = vmul.f32 %v829, %v893
    %v895 = vmul.f32 %v831, %v712
    %v896 = vadd.f32 %v894, %v895
    %898 = vrot.lane.b32.xlu0 %v896, 32
    %v899 = vpop.permute.xlu0 %898
    %901 = vrot.lane.b32.xlu0 %v783, 64
    %v902 = vpop.permute.xlu0 %901
    %v904 = vsel %vm94, %v899, %v902
    %v906 = vsel %vm165, %v904, 0
    %908 = vmatpush.msra.mxu0 0.0
    %909 = vmatpush.msra.mxu0 0.0
    %910 = vmatpush.msra.mxu0 0.0
    %911 = vmatpush.msra.mxu0 0.0
    %912 = vmatpush.msra.mxu0 0.0
    %913 = vmatpush.msra.mxu0 0.0
    %914 = vmatpush.msra.mxu0 0.0
    %915 = vmatpush.msra.mxu0 0.0
    %916 = vmatpush.msra.mxu0 %v89
    %917 = vmatpush.msra.mxu0 %v88
    %918 = vmatpush.msra.mxu0 %v87
    %919 = vmatpush.msra.mxu0 %v86
    %920 = vmatpush.msra.mxu0 %v85
    %921 = vmatpush.msra.mxu0 %v84
    %922 = vmatpush.msra.mxu0 %v83
    %923 = vmatpush.msra.mxu0 %v82
    %924 = vmatmul.f32.gmra.mxu0 %v906
    %v925 = vpop.f32.mrf.mxu0
    %v926 = vadd.f32 %v163, %v925
    %927 = vdwg.mxu0
    %v928 = vxor.u32 %v926, 2147483648
    %v929 = vmul.f32 %v928, 1.442695
    %v930 = vpow.pop %v929
    %v931 = vadd.f32 %v930, 1.0
    %v932 = vrcp.pop %v931
    %v933 = vmul.f32 %v931, %v932
    %v934 = vsub.f32 1.0, %v933
    %v935 = vmul.f32 %v932, %v934
    %v936 = vadd.f32 %v932, %v935
    %vm937 = vweird.f32 %v931
    %vm938 = vweird.f32 %v932
    %vm939 = vmor %vm937, %vm938
    %v940 = vsel %vm939, %v932, %v936
    %v941 = vand.u32 2147483647, %v931
    %vm942 = vcmp.eq.f32.partialorder %v941, 8.507059e+37
    %v943 = vand.u32 %v931, 2147483648
    %v944 = vor.u32 1.1754944e-38, %v943
    %v945 = vsel %vm942, %v944, %v940
    %v946 = vmul.f32 1.0, %v945
    %v947 = vtanh.pop %v926
    %v948 = vmul.f32 %v946, %v774
    %950 = vrot.lane.b32.xlu0 %v947, 64
    %v951 = vpop.permute.xlu0 %950
    %v953 = vmul.f32 %v946, %v951
    %955 = vrot.lane.b32.xlu0 %v953, 32
    %v956 = vpop.permute.xlu0 %955
    %v958 = vadd.f32 %v948, %v956
    %v959 = vtanh.pop %v958
    %961 = vrot.lane.b32.xlu0 %v959, 64
    %v962 = vpop.permute.xlu0 %961
    %v964 = vmul.f32 %v946, %v962
    %v965 = vmul.f32 %v829, %v964
    %v966 = vmul.f32 %v831, %v783
    %v967 = vadd.f32 %v965, %v966
    %v968 = vmul.f32 %v958, %v230
    %970 = vrot.lane.b32.xlu0 %v968, 96
    %v971 = vpop.permute.xlu0 %970
    %v973 = vsel %vm237, %v971, 0.0
    %974 = vadd.xlane.f32.xlu0 %v973
    %v975 = vpop.xlane.xlu0 %974
    %v976 = vadd.f32 %v975, %v242
    %v977 = vxor.u32 %v976, 2147483648
    %v978 = vmul.f32 %v977, 1.442695
    %v979 = vpow.pop %v978
    %v980 = vadd.f32 %v979, 1.0
    %v981 = vrcp.pop %v980
    %v982 = vmul.f32 %v980, %v981
    %v983 = vsub.f32 1.0, %v982
    %v984 = vmul.f32 %v981, %v983
    %v985 = vadd.f32 %v981, %v984
    %vm986 = vweird.f32 %v980
    %vm987 = vweird.f32 %v981
    %vm988 = vmor %vm986, %vm987
    %v989 = vsel %vm988, %v981, %v985
    %v990 = vand.u32 2147483647, %v980
    %vm991 = vcmp.eq.f32.partialorder %v990, 8.507059e+37
    %v992 = vand.u32 %v980, 2147483648
    %v993 = vor.u32 1.1754944e-38, %v992
    %v994 = vsel %vm991, %v993, %v989
    %v995 = vmul.f32 1.0, %v994
    %v996 = vmul.f32 %v825, %v995
    %v997 = vsub.f32 1.0, %v825
    %v998 = vsub.f32 1.0, %v818
    %v999 = vmin.f32 %v995, %v998
    %v1000 = vadd.f32 %v818, %v999
    %v1001 = vmul.f32 %v997, %v1000
    %v1002 = vadd.f32 %v996, %v1001
    %1004 = vrot.lane.b32.xlu0 %v967, 32
    %v1005 = vpop.permute.xlu0 %1004
    %s1007 = scalar_lea.vmem [#allocation9], 8
    %1008 = vst.msk [vmem:[%s1007] sm:$0x3] %vm237, %v1005
    %v1009 = vround.ne.pseudo %v1002
    %1011 = vset.pattern.permute.xlu0 0
    %1012 = vperm.xlu0 %1011, %v1009
    %v1013 = vpop.permute.xlu0 %1012
    %v1015 = vsub.f32 1.0, %v1013
    %s1016 = scalar_lea.vmem [#allocation3], 10
    %v1017 = vld [vmem:[%s1016] sm:$0x3]
    %v1018 = vsel %vm94, %v899, 0
    %1020 = vmatpush.msra.mxu0 0.0
    %1021 = vmatpush.msra.mxu0 0.0
    %1022 = vmatpush.msra.mxu0 0.0
    %1023 = vmatpush.msra.mxu0 0.0
    %1024 = vmatpush.msra.mxu0 0.0
    %1025 = vmatpush.msra.mxu0 0.0
    %1026 = vmatpush.msra.mxu0 0.0
    %1027 = vmatpush.msra.mxu0 0.0
    %1028 = vmatpush.msra.mxu0 0.0
    %1029 = vmatpush.msra.mxu0 0.0
    %1030 = vmatpush.msra.mxu0 0.0
    %1031 = vmatpush.msra.mxu0 0.0
    %1032 = vmatpush.msra.mxu0 %v81
    %1033 = vmatpush.msra.mxu0 %v80
    %1034 = vmatpush.msra.mxu0 %v79
    %1035 = vmatpush.msra.mxu0 %v78
    %1036 = vmatmul.f32.gmra.mxu0 %v1018
    %v1037 = vpop.f32.mrf.mxu0
    %v1038 = vadd.f32 0.0, %v1037
    %1039 = vdwg.mxu0
    %v1040 = vadd.f32 %v1017, %v1038
    %v1041 = vxor.u32 %v1040, 2147483648
    %v1042 = vmul.f32 %v1041, 1.442695
    %v1043 = vpow.pop %v1042
    %v1044 = vadd.f32 %v1043, 1.0
    %v1045 = vrcp.pop %v1044
    %v1046 = vmul.f32 %v1044, %v1045
    %v1047 = vsub.f32 1.0, %v1046
    %v1048 = vmul.f32 %v1045, %v1047
    %v1049 = vadd.f32 %v1045, %v1048
    %vm1050 = vweird.f32 %v1044
    %vm1051 = vweird.f32 %v1045
    %vm1052 = vmor %vm1050, %vm1051
    %v1053 = vsel %vm1052, %v1045, %v1049
    %v1054 = vand.u32 2147483647, %v1044
    %vm1055 = vcmp.eq.f32.partialorder %v1054, 8.507059e+37
    %v1056 = vand.u32 %v1044, 2147483648
    %v1057 = vor.u32 1.1754944e-38, %v1056
    %v1058 = vsel %vm1055, %v1057, %v1053
    %v1059 = vmul.f32 1.0, %v1058
    %v1060 = vtanh.pop %v1040
    %v1061 = vmul.f32 %v1059, %v887
    %1063 = vrot.lane.b32.xlu0 %v1060, 64
    %v1064 = vpop.permute.xlu0 %1063
    %v1066 = vmul.f32 %v1059, %v1064
    %1068 = vrot.lane.b32.xlu0 %v1066, 32
    %v1069 = vpop.permute.xlu0 %1068
    %v1071 = vadd.f32 %v1061, %v1069
    %v1072 = vtanh.pop %v1071
    %1074 = vrot.lane.b32.xlu0 %v1072, 64
    %v1075 = vpop.permute.xlu0 %1074
    %v1077 = vmul.f32 %v1059, %v1075
    %v1078 = vmul.f32 %v1013, %v1077
    %v1079 = vmul.f32 %v1015, %v896
    %v1080 = vadd.f32 %v1078, %v1079
    %1082 = vrot.lane.b32.xlu0 %v1080, 32
    %v1083 = vpop.permute.xlu0 %1082
    %1085 = vrot.lane.b32.xlu0 %v967, 64
    %v1086 = vpop.permute.xlu0 %1085
    %v1088 = vsel %vm94, %v1083, %v1086
    %v1090 = vsel %vm165, %v1088, 0
    %1092 = vmatpush.msra.mxu0 0.0
    %1093 = vmatpush.msra.mxu0 0.0
    %1094 = vmatpush.msra.mxu0 0.0
    %1095 = vmatpush.msra.mxu0 0.0
    %1096 = vmatpush.msra.mxu0 0.0
    %1097 = vmatpush.msra.mxu0 0.0
    %1098 = vmatpush.msra.mxu0 0.0
    %1099 = vmatpush.msra.mxu0 0.0
    %1100 = vmatpush.msra.mxu0 %v89
    %1101 = vmatpush.msra.mxu0 %v88
    %1102 = vmatpush.msra.mxu0 %v87
    %1103 = vmatpush.msra.mxu0 %v86
    %1104 = vmatpush.msra.mxu0 %v85
    %1105 = vmatpush.msra.mxu0 %v84
    %1106 = vmatpush.msra.mxu0 %v83
    %1107 = vmatpush.msra.mxu0 %v82
    %1108 = vmatmul.f32.gmra.mxu0 %v1090
    %v1109 = vpop.f32.mrf.mxu0
    %v1110 = vadd.f32 %v163, %v1109
    %1111 = vdwg.mxu0
    %v1112 = vxor.u32 %v1110, 2147483648
    %v1113 = vmul.f32 %v1112, 1.442695
    %v1114 = vpow.pop %v1113
    %v1115 = vadd.f32 %v1114, 1.0
    %v1116 = vrcp.pop %v1115
    %v1117 = vmul.f32 %v1115, %v1116
    %v1118 = vsub.f32 1.0, %v1117
    %v1119 = vmul.f32 %v1116, %v1118
    %v1120 = vadd.f32 %v1116, %v1119
    %vm1121 = vweird.f32 %v1115
    %vm1122 = vweird.f32 %v1116
    %vm1123 = vmor %vm1121, %vm1122
    %v1124 = vsel %vm1123, %v1116, %v1120
    %v1125 = vand.u32 2147483647, %v1115
    %vm1126 = vcmp.eq.f32.partialorder %v1125, 8.507059e+37
    %v1127 = vand.u32 %v1115, 2147483648
    %v1128 = vor.u32 1.1754944e-38, %v1127
    %v1129 = vsel %vm1126, %v1128, %v1124
    %v1130 = vmul.f32 1.0, %v1129
    %v1131 = vtanh.pop %v1110
    %v1132 = vmul.f32 %v1130, %v958
    %1134 = vrot.lane.b32.xlu0 %v1131, 64
    %v1135 = vpop.permute.xlu0 %1134
    %v1137 = vmul.f32 %v1130, %v1135
    %1139 = vrot.lane.b32.xlu0 %v1137, 32
    %v1140 = vpop.permute.xlu0 %1139
    %v1142 = vadd.f32 %v1132, %v1140
    %v1143 = vtanh.pop %v1142
    %1145 = vrot.lane.b32.xlu0 %v1143, 64
    %v1146 = vpop.permute.xlu0 %1145
    %v1148 = vmul.f32 %v1130, %v1146
    %v1149 = vmul.f32 %v1013, %v1148
    %v1150 = vmul.f32 %v1015, %v967
    %v1151 = vadd.f32 %v1149, %v1150
    %v1152 = vmul.f32 %v1142, %v230
    %1154 = vrot.lane.b32.xlu0 %v1152, 96
    %v1155 = vpop.permute.xlu0 %1154
    %v1157 = vsel %vm237, %v1155, 0.0
    %1158 = vadd.xlane.f32.xlu0 %v1157
    %v1159 = vpop.xlane.xlu0 %1158
    %v1160 = vadd.f32 %v1159, %v242
    %v1161 = vxor.u32 %v1160, 2147483648
    %v1162 = vmul.f32 %v1161, 1.442695
    %v1163 = vpow.pop %v1162
    %v1164 = vadd.f32 %v1163, 1.0
    %v1165 = vrcp.pop %v1164
    %v1166 = vmul.f32 %v1164, %v1165
    %v1167 = vsub.f32 1.0, %v1166
    %v1168 = vmul.f32 %v1165, %v1167
    %v1169 = vadd.f32 %v1165, %v1168
    %vm1170 = vweird.f32 %v1164
    %vm1171 = vweird.f32 %v1165
    %vm1172 = vmor %vm1170, %vm1171
    %v1173 = vsel %vm1172, %v1165, %v1169
    %v1174 = vand.u32 2147483647, %v1164
    %vm1175 = vcmp.eq.f32.partialorder %v1174, 8.507059e+37
    %v1176 = vand.u32 %v1164, 2147483648
    %v1177 = vor.u32 1.1754944e-38, %v1176
    %v1178 = vsel %vm1175, %v1177, %v1173
    %v1179 = vmul.f32 1.0, %v1178
    %v1180 = vmul.f32 %v1009, %v1179
    %v1181 = vsub.f32 1.0, %v1009
    %v1182 = vsub.f32 1.0, %v1002
    %v1183 = vmin.f32 %v1179, %v1182
    %v1184 = vadd.f32 %v1002, %v1183
    %v1185 = vmul.f32 %v1181, %v1184
    %v1186 = vadd.f32 %v1180, %v1185
    %1188 = vrot.lane.b32.xlu0 %v1151, 32
    %v1189 = vpop.permute.xlu0 %1188
    %s1191 = scalar_lea.vmem [#allocation9], 10
    %1192 = vst.msk [vmem:[%s1191] sm:$0x3] %vm237, %v1189
    %v1193 = vround.ne.pseudo %v1186
    %1195 = vset.pattern.permute.xlu0 0
    %1196 = vperm.xlu0 %1195, %v1193
    %v1197 = vpop.permute.xlu0 %1196
    %v1199 = vsub.f32 1.0, %v1197
    %s1200 = scalar_lea.vmem [#allocation3], 12
    %v1201 = vld [vmem:[%s1200] sm:$0x3]
    %v1202 = vsel %vm94, %v1083, 0
    %1204 = vmatpush.msra.mxu0 0.0
    %1205 = vmatpush.msra.mxu0 0.0
    %1206 = vmatpush.msra.mxu0 0.0
    %1207 = vmatpush.msra.mxu0 0.0
    %1208 = vmatpush.msra.mxu0 0.0
    %1209 = vmatpush.msra.mxu0 0.0
    %1210 = vmatpush.msra.mxu0 0.0
    %1211 = vmatpush.msra.mxu0 0.0
    %1212 = vmatpush.msra.mxu0 0.0
    %1213 = vmatpush.msra.mxu0 0.0
    %1214 = vmatpush.msra.mxu0 0.0
    %1215 = vmatpush.msra.mxu0 0.0
    %1216 = vmatpush.msra.mxu0 %v81
    %1217 = vmatpush.msra.mxu0 %v80
    %1218 = vmatpush.msra.mxu0 %v79
    %1219 = vmatpush.msra.mxu0 %v78
    %1220 = vmatmul.f32.gmra.mxu0 %v1202
    %v1221 = vpop.f32.mrf.mxu0
    %v1222 = vadd.f32 0.0, %v1221
    %1223 = vdwg.mxu0
    %v1224 = vadd.f32 %v1201, %v1222
    %v1225 = vxor.u32 %v1224, 2147483648
    %v1226 = vmul.f32 %v1225, 1.442695
    %v1227 = vpow.pop %v1226
    %v1228 = vadd.f32 %v1227, 1.0
    %v1229 = vrcp.pop %v1228
    %v1230 = vmul.f32 %v1228, %v1229
    %v1231 = vsub.f32 1.0, %v1230
    %v1232 = vmul.f32 %v1229, %v1231
    %v1233 = vadd.f32 %v1229, %v1232
    %vm1234 = vweird.f32 %v1228
    %vm1235 = vweird.f32 %v1229
    %vm1236 = vmor %vm1234, %vm1235
    %v1237 = vsel %vm1236, %v1229, %v1233
    %v1238 = vand.u32 2147483647, %v1228
    %vm1239 = vcmp.eq.f32.partialorder %v1238, 8.507059e+37
    %v1240 = vand.u32 %v1228, 2147483648
    %v1241 = vor.u32 1.1754944e-38, %v1240
    %v1242 = vsel %vm1239, %v1241, %v1237
    %v1243 = vmul.f32 1.0, %v1242
    %v1244 = vtanh.pop %v1224
    %v1245 = vmul.f32 %v1243, %v1071
    %1247 = vrot.lane.b32.xlu0 %v1244, 64
    %v1248 = vpop.permute.xlu0 %1247
    %v1250 = vmul.f32 %v1243, %v1248
    %1252 = vrot.lane.b32.xlu0 %v1250, 32
    %v1253 = vpop.permute.xlu0 %1252
    %v1255 = vadd.f32 %v1245, %v1253
    %v1256 = vtanh.pop %v1255
    %1258 = vrot.lane.b32.xlu0 %v1256, 64
    %v1259 = vpop.permute.xlu0 %1258
    %v1261 = vmul.f32 %v1243, %v1259
    %v1262 = vmul.f32 %v1197, %v1261
    %v1263 = vmul.f32 %v1199, %v1080
    %v1264 = vadd.f32 %v1262, %v1263
    %1266 = vrot.lane.b32.xlu0 %v1264, 32
    %v1267 = vpop.permute.xlu0 %1266
    %1269 = vrot.lane.b32.xlu0 %v1151, 64
    %v1270 = vpop.permute.xlu0 %1269
    %v1272 = vsel %vm94, %v1267, %v1270
    %v1274 = vsel %vm165, %v1272, 0
    %1276 = vmatpush.msra.mxu0 0.0
    %1277 = vmatpush.msra.mxu0 0.0
    %1278 = vmatpush.msra.mxu0 0.0
    %1279 = vmatpush.msra.mxu0 0.0
    %1280 = vmatpush.msra.mxu0 0.0
    %1281 = vmatpush.msra.mxu0 0.0
    %1282 = vmatpush.msra.mxu0 0.0
    %1283 = vmatpush.msra.mxu0 0.0
    %1284 = vmatpush.msra.mxu0 %v89
    %1285 = vmatpush.msra.mxu0 %v88
    %1286 = vmatpush.msra.mxu0 %v87
    %1287 = vmatpush.msra.mxu0 %v86
    %1288 = vmatpush.msra.mxu0 %v85
    %1289 = vmatpush.msra.mxu0 %v84
    %1290 = vmatpush.msra.mxu0 %v83
    %1291 = vmatpush.msra.mxu0 %v82
    %1292 = vmatmul.f32.gmra.mxu0 %v1274
    %v1293 = vpop.f32.mrf.mxu0
    %v1294 = vadd.f32 %v163, %v1293
    %1295 = vdwg.mxu0
    %v1296 = vxor.u32 %v1294, 2147483648
    %v1297 = vmul.f32 %v1296, 1.442695
    %v1298 = vpow.pop %v1297
    %v1299 = vadd.f32 %v1298, 1.0
    %v1300 = vrcp.pop %v1299
    %v1301 = vmul.f32 %v1299, %v1300
    %v1302 = vsub.f32 1.0, %v1301
    %v1303 = vmul.f32 %v1300, %v1302
    %v1304 = vadd.f32 %v1300, %v1303
    %vm1305 = vweird.f32 %v1299
    %vm1306 = vweird.f32 %v1300
    %vm1307 = vmor %vm1305, %vm1306
    %v1308 = vsel %vm1307, %v1300, %v1304
    %v1309 = vand.u32 2147483647, %v1299
    %vm1310 = vcmp.eq.f32.partialorder %v1309, 8.507059e+37
    %v1311 = vand.u32 %v1299, 2147483648
    %v1312 = vor.u32 1.1754944e-38, %v1311
    %v1313 = vsel %vm1310, %v1312, %v1308
    %v1314 = vmul.f32 1.0, %v1313
    %v1315 = vtanh.pop %v1294
    %v1316 = vmul.f32 %v1314, %v1142
    %1318 = vrot.lane.b32.xlu0 %v1315, 64
    %v1319 = vpop.permute.xlu0 %1318
    %v1321 = vmul.f32 %v1314, %v1319
    %1323 = vrot.lane.b32.xlu0 %v1321, 32
    %v1324 = vpop.permute.xlu0 %1323
    %v1326 = vadd.f32 %v1316, %v1324
    %v1327 = vtanh.pop %v1326
    %1329 = vrot.lane.b32.xlu0 %v1327, 64
    %v1330 = vpop.permute.xlu0 %1329
    %v1332 = vmul.f32 %v1314, %v1330
    %v1333 = vmul.f32 %v1197, %v1332
    %v1334 = vmul.f32 %v1199, %v1151
    %v1335 = vadd.f32 %v1333, %v1334
    %v1336 = vmul.f32 %v1326, %v230
    %1338 = vrot.lane.b32.xlu0 %v1336, 96
    %v1339 = vpop.permute.xlu0 %1338
    %v1341 = vsel %vm237, %v1339, 0.0
    %1342 = vadd.xlane.f32.xlu0 %v1341
    %v1343 = vpop.xlane.xlu0 %1342
    %v1344 = vadd.f32 %v1343, %v242
    %v1345 = vxor.u32 %v1344, 2147483648
    %v1346 = vmul.f32 %v1345, 1.442695
    %v1347 = vpow.pop %v1346
    %v1348 = vadd.f32 %v1347, 1.0
    %v1349 = vrcp.pop %v1348
    %v1350 = vmul.f32 %v1348, %v1349
    %v1351 = vsub.f32 1.0, %v1350
    %v1352 = vmul.f32 %v1349, %v1351
    %v1353 = vadd.f32 %v1349, %v1352
    %vm1354 = vweird.f32 %v1348
    %vm1355 = vweird.f32 %v1349
    %vm1356 = vmor %vm1354, %vm1355
    %v1357 = vsel %vm1356, %v1349, %v1353
    %v1358 = vand.u32 2147483647, %v1348
    %vm1359 = vcmp.eq.f32.partialorder %v1358, 8.507059e+37
    %v1360 = vand.u32 %v1348, 2147483648
    %v1361 = vor.u32 1.1754944e-38, %v1360
    %v1362 = vsel %vm1359, %v1361, %v1357
    %v1363 = vmul.f32 1.0, %v1362
    %v1364 = vmul.f32 %v1193, %v1363
    %v1365 = vsub.f32 1.0, %v1193
    %v1366 = vsub.f32 1.0, %v1186
    %v1367 = vmin.f32 %v1363, %v1366
    %v1368 = vadd.f32 %v1186, %v1367
    %v1369 = vmul.f32 %v1365, %v1368
    %v1370 = vadd.f32 %v1364, %v1369
    %1372 = vrot.lane.b32.xlu0 %v1335, 32
    %v1373 = vpop.permute.xlu0 %1372
    %s1375 = scalar_lea.vmem [#allocation9], 12
    %1376 = vst.msk [vmem:[%s1375] sm:$0x3] %vm237, %v1373
    %v1377 = vround.ne.pseudo %v1370
    %1379 = vset.pattern.permute.xlu0 0
    %1380 = vperm.xlu0 %1379, %v1377
    %v1381 = vpop.permute.xlu0 %1380
    %v1383 = vsub.f32 1.0, %v1381
    %s1384 = scalar_lea.vmem [#allocation3], 14
    %v1385 = vld [vmem:[%s1384] sm:$0x3]
    %v1386 = vsel %vm94, %v1267, 0
    %1388 = vmatpush.msra.mxu0 0.0
    %1389 = vmatpush.msra.mxu0 0.0
    %1390 = vmatpush.msra.mxu0 0.0
    %1391 = vmatpush.msra.mxu0 0.0
    %1392 = vmatpush.msra.mxu0 0.0
    %1393 = vmatpush.msra.mxu0 0.0
    %1394 = vmatpush.msra.mxu0 0.0
    %1395 = vmatpush.msra.mxu0 0.0
    %1396 = vmatpush.msra.mxu0 0.0
    %1397 = vmatpush.msra.mxu0 0.0
    %1398 = vmatpush.msra.mxu0 0.0
    %1399 = vmatpush.msra.mxu0 0.0
    %1400 = vmatpush.msra.mxu0 %v81
    %1401 = vmatpush.msra.mxu0 %v80
    %1402 = vmatpush.msra.mxu0 %v79
    %1403 = vmatpush.msra.mxu0 %v78
    %1404 = vmatmul.f32.gmra.mxu0 %v1386
    %v1405 = vpop.f32.mrf.mxu0
    %v1406 = vadd.f32 0.0, %v1405
    %1407 = vdwg.mxu0
    %v1408 = vadd.f32 %v1385, %v1406
    %v1409 = vxor.u32 %v1408, 2147483648
    %v1410 = vmul.f32 %v1409, 1.442695
    %v1411 = vpow.pop %v1410
    %v1412 = vadd.f32 %v1411, 1.0
    %v1413 = vrcp.pop %v1412
    %v1414 = vmul.f32 %v1412, %v1413
    %v1415 = vsub.f32 1.0, %v1414
    %v1416 = vmul.f32 %v1413, %v1415
    %v1417 = vadd.f32 %v1413, %v1416
    %vm1418 = vweird.f32 %v1412
    %vm1419 = vweird.f32 %v1413
    %vm1420 = vmor %vm1418, %vm1419
    %v1421 = vsel %vm1420, %v1413, %v1417
    %v1422 = vand.u32 2147483647, %v1412
    %vm1423 = vcmp.eq.f32.partialorder %v1422, 8.507059e+37
    %v1424 = vand.u32 %v1412, 2147483648
    %v1425 = vor.u32 1.1754944e-38, %v1424
    %v1426 = vsel %vm1423, %v1425, %v1421
    %v1427 = vmul.f32 1.0, %v1426
    %v1428 = vtanh.pop %v1408
    %v1429 = vmul.f32 %v1427, %v1255
    %1431 = vrot.lane.b32.xlu0 %v1428, 64
    %v1432 = vpop.permute.xlu0 %1431
    %v1434 = vmul.f32 %v1427, %v1432
    %1436 = vrot.lane.b32.xlu0 %v1434, 32
    %v1437 = vpop.permute.xlu0 %1436
    %v1439 = vadd.f32 %v1429, %v1437
    %v1440 = vtanh.pop %v1439
    %1442 = vrot.lane.b32.xlu0 %v1440, 64
    %v1443 = vpop.permute.xlu0 %1442
    %v1445 = vmul.f32 %v1427, %v1443
    %v1446 = vmul.f32 %v1381, %v1445
    %v1447 = vmul.f32 %v1383, %v1264
    %v1448 = vadd.f32 %v1446, %v1447
    %1450 = vrot.lane.b32.xlu0 %v1448, 32
    %v1451 = vpop.permute.xlu0 %1450
    %1453 = vrot.lane.b32.xlu0 %v1335, 64
    %v1454 = vpop.permute.xlu0 %1453
    %v1456 = vsel %vm94, %v1451, %v1454
    %v1458 = vsel %vm165, %v1456, 0
    %1460 = vmatpush.msra.mxu0 0.0
    %1461 = vmatpush.msra.mxu0 0.0
    %1462 = vmatpush.msra.mxu0 0.0
    %1463 = vmatpush.msra.mxu0 0.0
    %1464 = vmatpush.msra.mxu0 0.0
    %1465 = vmatpush.msra.mxu0 0.0
    %1466 = vmatpush.msra.mxu0 0.0
    %1467 = vmatpush.msra.mxu0 0.0
    %1468 = vmatpush.msra.mxu0 %v89
    %1469 = vmatpush.msra.mxu0 %v88
    %1470 = vmatpush.msra.mxu0 %v87
    %1471 = vmatpush.msra.mxu0 %v86
    %1472 = vmatpush.msra.mxu0 %v85
    %1473 = vmatpush.msra.mxu0 %v84
    %1474 = vmatpush.msra.mxu0 %v83
    %1475 = vmatpush.msra.mxu0 %v82
    %1476 = vmatmul.f32.gmra.mxu0 %v1458
    %v1477 = vpop.f32.mrf.mxu0
    %v1478 = vadd.f32 %v163, %v1477
    %1479 = vdwg.mxu0
    %v1480 = vxor.u32 %v1478, 2147483648
    %v1481 = vmul.f32 %v1480, 1.442695
    %v1482 = vpow.pop %v1481
    %v1483 = vadd.f32 %v1482, 1.0
    %v1484 = vrcp.pop %v1483
    %v1485 = vmul.f32 %v1483, %v1484
    %v1486 = vsub.f32 1.0, %v1485
    %v1487 = vmul.f32 %v1484, %v1486
    %v1488 = vadd.f32 %v1484, %v1487
    %vm1489 = vweird.f32 %v1483
    %vm1490 = vweird.f32 %v1484
    %vm1491 = vmor %vm1489, %vm1490
    %v1492 = vsel %vm1491, %v1484, %v1488
    %v1493 = vand.u32 2147483647, %v1483
    %vm1494 = vcmp.eq.f32.partialorder %v1493, 8.507059e+37
    %v1495 = vand.u32 %v1483, 2147483648
    %v1496 = vor.u32 1.1754944e-38, %v1495
    %v1497 = vsel %vm1494, %v1496, %v1492
    %v1498 = vmul.f32 1.0, %v1497
    %v1499 = vtanh.pop %v1478
    %v1500 = vmul.f32 %v1498, %v1326
    %1502 = vrot.lane.b32.xlu0 %v1499, 64
    %v1503 = vpop.permute.xlu0 %1502
    %v1505 = vmul.f32 %v1498, %v1503
    %1507 = vrot.lane.b32.xlu0 %v1505, 32
    %v1508 = vpop.permute.xlu0 %1507
    %v1510 = vadd.f32 %v1500, %v1508
    %v1511 = vtanh.pop %v1510
    %1513 = vrot.lane.b32.xlu0 %v1511, 64
    %v1514 = vpop.permute.xlu0 %1513
    %v1516 = vmul.f32 %v1498, %v1514
    %v1517 = vmul.f32 %v1381, %v1516
    %v1518 = vmul.f32 %v1383, %v1335
    %v1519 = vadd.f32 %v1517, %v1518
    %v1520 = vmul.f32 %v1510, %v230
    %1522 = vrot.lane.b32.xlu0 %v1520, 96
    %v1523 = vpop.permute.xlu0 %1522
    %v1525 = vsel %vm237, %v1523, 0.0
    %1526 = vadd.xlane.f32.xlu0 %v1525
    %v1527 = vpop.xlane.xlu0 %1526
    %v1528 = vadd.f32 %v1527, %v242
    %v1529 = vxor.u32 %v1528, 2147483648
    %v1530 = vmul.f32 %v1529, 1.442695
    %v1531 = vpow.pop %v1530
    %v1532 = vadd.f32 %v1531, 1.0
    %v1533 = vrcp.pop %v1532
    %v1534 = vmul.f32 %v1532, %v1533
    %v1535 = vsub.f32 1.0, %v1534
    %v1536 = vmul.f32 %v1533, %v1535
    %v1537 = vadd.f32 %v1533, %v1536
    %vm1538 = vweird.f32 %v1532
    %vm1539 = vweird.f32 %v1533
    %vm1540 = vmor %vm1538, %vm1539
    %v1541 = vsel %vm1540, %v1533, %v1537
    %v1542 = vand.u32 2147483647, %v1532
    %vm1543 = vcmp.eq.f32.partialorder %v1542, 8.507059e+37
    %v1544 = vand.u32 %v1532, 2147483648
    %v1545 = vor.u32 1.1754944e-38, %v1544
    %v1546 = vsel %vm1543, %v1545, %v1541
    %v1547 = vmul.f32 1.0, %v1546
    %v1548 = vmul.f32 %v1377, %v1547
    %v1549 = vsub.f32 1.0, %v1377
    %v1550 = vsub.f32 1.0, %v1370
    %v1551 = vmin.f32 %v1547, %v1550
    %v1552 = vadd.f32 %v1370, %v1551
    %v1553 = vmul.f32 %v1549, %v1552
    %v1554 = vadd.f32 %v1548, %v1553
    %1556 = vrot.lane.b32.xlu0 %v1519, 32
    %v1557 = vpop.permute.xlu0 %1556
    %s1559 = scalar_lea.vmem [#allocation9], 14
    %1560 = vst.msk [vmem:[%s1559] sm:$0x3] %vm237, %v1557
    %1561 = vst.msk [vmem:[#allocation10] sm:$0x3] %vm237, %v1451
    %1563 = vrot.lane.b32.xlu0 %v1439, 96
    %v1564 = vpop.permute.xlu0 %1563
    %1566 = vst.msk [vmem:[#allocation12] sm:$0x3] %vm237, %v1564
    %s1567 = scalar_lea.vmem [#allocation10], 2
    %1568 = vst.msk [vmem:[%s1567] sm:$0x3] %vm237, %v1557
    %1570 = vrot.lane.b32.xlu0 %v1510, 96
    %v1571 = vpop.permute.xlu0 %1570
    %s1573 = scalar_lea.vmem [#allocation12], 2
    %1574 = vst.msk [vmem:[%s1573] sm:$0x3] %vm237, %v1571
    %vm1575 = vcmask 1024
    %1576 = vst.msk [vmem:[%s9] sm:$0x3] %vm1575, %v1554
    // Predicated region
    $region38: #{tpu_custom_call.1} parent=1 // pred_check
      _
    $region39: #{tpu_custom_call.1} parent=1 // pred_check_branch
      %1578 = sbr.rel (0) target = $region41
    $region40: #{tpu_custom_call.1} parent=1 // pred_region
      %1580 = vsyncadd [#allocation5], 0
      %s1581 = sshll.u32 [#allocation9], 4
      %s1582 = int_to_ptr.vmem [resolvable:$true] %s1581
      %s1583 = sshll.u32 %s6, 4
      %s1584 = int_to_ptr.hbm [resolvable:$true] %s1583
      %1589 = dma.vmem_to_hbm [thread:$0]  %s1582, 256, %s1584, [#allocation5], 32, 32, 2
    $region41: #{tpu_custom_call.1} parent=1 // pred_fallthru
      _
    // Predicated region
    $region42: #{tpu_custom_call.1} parent=1 // pred_check
      _
    $region43: #{tpu_custom_call.1} parent=1 // pred_check_branch
      %1591 = sbr.rel (0) target = $region45
    $region44: #{tpu_custom_call.1} parent=1 // pred_region
      %1593 = vsyncadd [#allocation11], 0
      %s1594 = sshll.u32 [#allocation10], 4
      %s1595 = int_to_ptr.vmem [resolvable:$true] %s1594
      %s1596 = sshll.u32 %s7, 4
      %s1597 = int_to_ptr.hbm [resolvable:$true] %s1596
      %1602 = dma.vmem_to_hbm [thread:$0]  %s1595, 64, %s1597, [#allocation11], 32, 32, 2
    $region45: #{tpu_custom_call.1} parent=1 // pred_fallthru
      _
    // Predicated region
    $region46: #{tpu_custom_call.1} parent=1 // pred_check
      _
    $region47: #{tpu_custom_call.1} parent=1 // pred_check_branch
      %1604 = sbr.rel (0) target = $region49
    $region48: #{tpu_custom_call.1} parent=1 // pred_region
      %1606 = vsyncadd [#allocation11], 0
      %s1607 = sshll.u32 [#allocation12], 4
      %s1608 = int_to_ptr.vmem [resolvable:$true] %s1607
      %s1609 = sshll.u32 %s8, 4
      %s1610 = int_to_ptr.hbm [resolvable:$true] %s1609
      %1615 = dma.vmem_to_hbm [thread:$0]  %s1608, 64, %s1610, [#allocation11], 32, 32, 2
    $region49: #{tpu_custom_call.1} parent=1 // pred_fallthru
      _
    // Predicated region
    $region50: #{tpu_custom_call.1} parent=1 // pred_check
      _
    $region51: #{tpu_custom_call.1} parent=1 // pred_check_branch
      %1617 = sbr.rel (0) target = $region53
    $region52: #{tpu_custom_call.1} parent=1 // pred_region
      _
    $region53: #{tpu_custom_call.1} parent=1 // pred_fallthru
      _
    // Predicated region
    $region54: #{tpu_custom_call.1} parent=1 // pred_check
      _
    $region55: #{tpu_custom_call.1} parent=1 // pred_check_branch
      %1619 = sbr.rel (0) target = $region57
    $region56: #{tpu_custom_call.1} parent=1 // pred_region
      %1621 = dma.done [#allocation5], 256
    $region57: #{tpu_custom_call.1} parent=1 // pred_fallthru
      _
    // Predicated region
    $region58: #{tpu_custom_call.1} parent=1 // pred_check
      _
    $region59: #{tpu_custom_call.1} parent=1 // pred_check_branch
      %1623 = sbr.rel (0) target = $region61
    $region60: #{tpu_custom_call.1} parent=1 // pred_region
      %1625 = dma.done [#allocation11], 64
    $region61: #{tpu_custom_call.1} parent=1 // pred_fallthru
      _
    // Predicated region
    $region62: #{tpu_custom_call.1} parent=1 // pred_check
      _
    $region63: #{tpu_custom_call.1} parent=1 // pred_check_branch
      %1627 = sbr.rel (0) target = $region65
    $region64: #{tpu_custom_call.1} parent=1 // pred_region
      %1629 = dma.done [#allocation11], 64
    $region65: #{tpu_custom_call.1} parent=1 // pred_fallthru
      _
    // Predicated region
    $region66: #{tpu_custom_call.1} parent=1 // pred_check
      _
    $region67: #{tpu_custom_call.1} parent=1 // pred_check_branch
      %1631 = sbr.rel (0) target = $region69
    $region68: #{tpu_custom_call.1} parent=1 // pred_region
      _
    $region69: #{tpu_custom_call.1} parent=1 // pred_fallthru
      _
    %1632 = vsyncpa [#allocation4], 1
    %1633 = vsyncpa [#allocation7], 1
    %1634 = vsyncpa [#allocation5], 1
    %1635 = vsyncpa [#allocation11], 1

</llo_original>
